<compile_context>
chip_gen: v7x
topology: tpu7x:2x2x1
jax: 0.10.0
libtpu: 0.0.40
codegen_flags: <defaults>
</compile_context>

<pallas_src>
import jax
import jax.numpy as jnp
from jax.experimental import pallas as pl
from jax.experimental.pallas import tpu as pltpu


# ------------------------------ small helpers -------------------------------

def _round_up(x, m):
    return ((x + m - 1) // m) * m


def _pairs(refs):
    return [(refs[i], refs[i + 1]) for i in range(0, len(refs), 2)]


def _flatten(params):
    flat = []
    for (w, b) in params:
        flat.extend([w, b])
    return flat


def _mlp_k(x, params):
    """Linear+ReLU chain on refs; no activation after the last layer."""
    n = len(params)
    for i, (w, b) in enumerate(params):
        x = jnp.dot(x, w[...], preferred_element_type=jnp.float32) + b[...]
        if i < n - 1:
            x = jax.nn.relu(x)
    return x


def _block_diag(mats):
    r_tot = sum(int(m.shape[0]) for m in mats)
    c_tot = sum(int(m.shape[1]) for m in mats)
    out = jnp.zeros((r_tot, c_tot), mats[0].dtype)
    r = c = 0
    for m in mats:
        out = out.at[r:r + m.shape[0], c:c + m.shape[1]].set(m)
        r += int(m.shape[0])
        c += int(m.shape[1])
    return out


def _fuse_heads(heads):
    """Fuse several 2-layer MLP heads sharing the same input into one
    Linear+ReLU+Linear (concat first layer, block-diagonal second layer)."""
    for h in heads:
        assert len(h) == 2, "fused decoder heads assume 2-layer MLPs"
        # TODO(synk): generalize head fusion to arbitrary-depth decoder MLPs.
    hw0 = jnp.concatenate([h[0][0] for h in heads], axis=1)
    hb0 = jnp.concatenate([h[0][1] for h in heads], axis=1)
    hw1 = _block_diag([h[1][0] for h in heads])
    hb1 = jnp.concatenate([h[1][1] for h in heads], axis=1)
    return hw0, hb0, hw1, hb1


def _const_spec(arr):
    # whole array per grid step, constant index map => DMA'd once, stays resident
    return pl.BlockSpec(arr.shape, lambda i: (0,) * arr.ndim)


# ----------------------------- Pallas kernels ------------------------------

def _make_reduce_kernel(n_enc, n_in, n_max):
    """Pass 1: encoder -> in_block -> max_block, cross-tile running max."""
    n_w = 2 * (n_enc + n_in + n_max)

    def kernel(*refs):
        z_ref = refs[0]
        wr = refs[1:1 + n_w]
        gmax_ref = refs[1 + n_w]                      # (1, 32*nb) accumulator

        enc = _pairs(wr[:2 * n_enc])
        inb = _pairs(wr[2 * n_enc:2 * (n_enc + n_in)])
        mxb = _pairs(wr[2 * (n_enc + n_in):])

        x = _mlp_k(z_ref[...], enc)
        x = _mlp_k(x, inb)
        g = _mlp_k(x, mxb)
        tile_max = jnp.max(g, axis=0, keepdims=True)

        @pl.when(pl.program_id(0) == 0)
        def _init():
            gmax_ref[...] = tile_max

        @pl.when(pl.program_id(0) != 0)
        def _acc():
            gmax_ref[...] = jnp.maximum(gmax_ref[...], tile_max)

    return kernel


def _make_head_kernel(n_enc, n_in):
    """Pass 2: recompute encoder/in_block, out_block + fcfinal + fused heads."""
    n_shared = 2 * (n_enc + n_in)

    def kernel(*refs):
        z_ref = refs[0]
        shared = refs[1:1 + n_shared]
        (ow0x, gmh, ow1, ob1, ow2, ob2, fw, fb,
         hw0, hb0, hw1, hb1, out_ref) = refs[1 + n_shared:]

        enc = _pairs(shared[:2 * n_enc])
        inb = _pairs(shared[2 * n_enc:])

        x = _mlp_k(z_ref[...], enc)
        x = _mlp_k(x, inb)

        # out_block layer 0 on concat([x, gmax_broadcast]) expressed as a
        # block matmul; the gmax @ W0[dz:] + b0 part is pre-folded into gmh.
        h = jax.nn.relu(
            jnp.dot(x, ow0x[...], preferred_element_type=jnp.float32) + gmh[...])
        h = jax.nn.relu(
            jnp.dot(h, ow1[...], preferred_element_type=jnp.float32) + ob1[...])
        h = jnp.dot(h, ow2[...], preferred_element_type=jnp.float32) + ob2[...]

        # fcfinal
        zf = jnp.dot(h, fw[...], preferred_element_type=jnp.float32) + fb[...]

        # all five decoder heads fused into one Linear+ReLU+Linear
        hh = jax.nn.relu(
            jnp.dot(zf, hw0[...], preferred_element_type=jnp.float32) + hb0[...])
        out_ref[...] = (jnp.dot(hh, hw1[...], preferred_element_type=jnp.float32)
                        + hb1[...])

    return kernel


# ------------------------------ forward wrapper ------------------------------

def pointnet_mtl_decoder_ii_forward(z, surf, P, tile_n=None):
    n, c_in = z.shape
    enc, inb, mxb, outb = P["encoder"], P["in_block"], P["max_block"], P["out_block"]
    assert len(outb) == 3, "out_block is a 3-layer MLP by construction"
    fw, fb = P["fcfinal"]

    # --- tile / pad the points dimension ----------------------------------
    if tile_n is None:
        tile_n = 4096
    tile_n = min(tile_n, _round_up(n, 8))
    n_pad = _round_up(n, tile_n)
    if n_pad != n:
        # replicate row 0: duplicates never change the global max; padded head
        # outputs are sliced off below.
        z_pad = jnp.concatenate(
            [z, jnp.broadcast_to(z[:1], (n_pad - n, c_in))], axis=0)
    else:
        z_pad = z
    grid = (n_pad // tile_n,)

    shared_flat = _flatten(enc) + _flatten(inb)

    # --- pass 1: cross-tile global max of max_block output ----------------
    p1_args = (z_pad, *shared_flat, *_flatten(mxb))
    g_dim = mxb[-1][0].shape[1]
    gmax = pl.pallas_call(
        _make_reduce_kernel(len(enc), len(inb), len(mxb)),
        out_shape=jax.ShapeDtypeStruct((1, g_dim), jnp.float32),
        grid=grid,
        in_specs=[pl.BlockSpec((tile_n, c_in), lambda i: (i, 0))]
                 + [_const_spec(a) for a in p1_args[1:]],
        out_specs=pl.BlockSpec((1, g_dim), lambda i: (0, 0)),
        compiler_params=pltpu.CompilerParams(
            dimension_semantics=("arbitrary",)),
    )(*p1_args)

    # --- hoist the (1,32nb)x(32nb,16nb) gmax matmul out of the tile loop ---
    dz = inb[-1][0].shape[1]                       # = 2 * base_nb
    ow0, ob0 = outb[0]
    gmax_h = jnp.dot(gmax, ow0[dz:, :], preferred_element_type=jnp.float32) + ob0
    ow0_x = ow0[:dz, :]

    # --- fuse the five decoder heads ---------------------------------------
    heads = [P["dec_surf"], P["dec_u"], P["dec_v"], P["dec_p"], P["dec_nut"]]
    hw0, hb0, hw1, hb1 = _fuse_heads(heads)
    ds_out = P["dec_surf"][-1][0].shape[1]
    out_cols = hw1.shape[1]

    # --- pass 2: out_block + fcfinal + fused decoder heads ------------------
    (ow1, ob1), (ow2, ob2) = outb[1], outb[2]
    p2_args = (z_pad, *shared_flat, ow0_x, gmax_h, ow1, ob1, ow2, ob2,
               fw, fb, hw0, hb0, hw1, hb1)
    out_all = pl.pallas_call(
        _make_head_kernel(len(enc), len(inb)),
        out_shape=jax.ShapeDtypeStruct((n_pad, out_cols), jnp.float32),
        grid=grid,
        in_specs=[pl.BlockSpec((tile_n, c_in), lambda i: (i, 0))]
                 + [_const_spec(a) for a in p2_args[1:]],
        out_specs=pl.BlockSpec((tile_n, out_cols), lambda i: (i, 0)),
        compiler_params=pltpu.CompilerParams(
            dimension_semantics=("parallel",)),
    )(*p2_args)

    out_all = out_all[:n]
    # data-dependent boolean gather (dynamic shape) stays outside the kernels,
    # but now only touches the tiny fused head output.
    out_surf = out_all[:, :ds_out][surf]
    out_vol = out_all[:, ds_out:][~surf]
    return out_surf, out_vol


# --------------------------- reference (pure JAX) ----------------------------

def _mlp_ref(x, params):
    for i, (w, b) in enumerate(params):
        x = x @ w + b
        if i < len(params) - 1:
            x = jax.nn.relu(x)
    return x


def forward_ref(z, surf, P):
    x = _mlp_ref(z, P["encoder"])
    x = _mlp_ref(x, P["in_block"])
    g = _mlp_ref(x, P["max_block"])
    gmax = jnp.max(g, axis=0, keepdims=True)               # global_max_pool (1 graph)
    gb = jnp.broadcast_to(gmax, (x.shape[0], g.shape[1]))  # repeat_interleave
    x = jnp.concatenate([x, gb], axis=1)
    x = _mlp_ref(x, P["out_block"])
    x = _mlp_ref(x, [P["fcfinal"]])
    xs, xv = x[surf], x[~surf]
    return (_mlp_ref(xs, P["dec_surf"]),
            jnp.concatenate([_mlp_ref(xv, P["dec_u"]), _mlp_ref(xv, P["dec_v"]),
                             _mlp_ref(xv, P["dec_p"]), _mlp_ref(xv, P["dec_nut"])],
                            axis=-1))


# ------------------------------ param init ----------------------------------

def init_linear(key, din, dout):
    kw, kb = jax.random.split(key)
    s = 1.0 / (din ** 0.5)
    w = jax.random.uniform(kw, (din, dout), jnp.float32, -s, s)
    b = jax.random.uniform(kb, (1, dout), jnp.float32, -s, s)
    return w, b


def init_mlp(key, channels):
    params = []
    for i in range(len(channels) - 1):
        key, sub = jax.random.split(key)
        params.append(init_linear(sub, channels[i], channels[i + 1]))
    return params


# --------------------------------- main --------------------------------------

if __name__ == "__main__":
    key = jax.random.PRNGKey(0)

    # small, forward-consistent config
    base_nb = 4
    encoder = [5, 16, 8]
    decoder_surf = [8, 16, 1]
    decoder_vol = [8, 16, 1]
    N = 200      # not a tile multiple -> exercises padding
    TILE = 64    # small tile so the demo runs a real multi-tile grid (4 tiles)

    keys = jax.random.split(key, 12)
    P = {
        "encoder":   init_mlp(keys[0], encoder),
        "in_block":  init_mlp(keys[1], [encoder[-1], base_nb, base_nb * 2]),
        "max_block": init_mlp(keys[2], [base_nb * 2, base_nb * 4, base_nb * 8, base_nb * 32]),
        "out_block": init_mlp(keys[3], [base_nb * 34, base_nb * 16, base_nb * 8, base_nb * 4]),
        "fcfinal":   init_linear(keys[4], base_nb * 4, encoder[-1]),
        "dec_surf":  init_mlp(keys[5], decoder_surf),
        "dec_u":     init_mlp(keys[6], decoder_vol),
        "dec_v":     init_mlp(keys[7], decoder_vol),
        "dec_p":     init_mlp(keys[8], decoder_vol),
        "dec_nut":   init_mlp(keys[9], decoder_vol),
    }

    z = jax.random.normal(keys[10], (N, encoder[0]), jnp.float32)
    surf = (jnp.arange(N) % 4) == 0  # deterministic boolean surface mask

    out_surf, out_vol = pointnet_mtl_decoder_ii_forward(z, surf, P, tile_n=TILE)
    jax.block_until_ready((out_surf, out_vol))

    ref_surf, ref_vol = forward_ref(z, surf, P)
    n_surf = int(surf.sum())
    assert out_surf.shape == (n_surf, decoder_surf[-1])
    assert out_vol.shape == (N - n_surf, 4 * decoder_vol[-1])
    assert jnp.allclose(out_surf, ref_surf, rtol=5e-2, atol=5e-2)
    assert jnp.allclose(out_vol, ref_vol, rtol=5e-2, atol=5e-2)

    print("KERNEL_OK")
</pallas_src>

<mosaic_0001>
module attributes {stable_mosaic.version = 11 : i64} {
  func.func @kernel(%arg0: i32, %arg1: memref<64x5xf32, #tpu.memory_space<vmem>>, %arg2: memref<5x16xf32, #tpu.memory_space<vmem>>, %arg3: memref<1x16xf32, #tpu.memory_space<vmem>>, %arg4: memref<16x8xf32, #tpu.memory_space<vmem>>, %arg5: memref<1x8xf32, #tpu.memory_space<vmem>>, %arg6: memref<8x4xf32, #tpu.memory_space<vmem>>, %arg7: memref<1x4xf32, #tpu.memory_space<vmem>>, %arg8: memref<4x8xf32, #tpu.memory_space<vmem>>, %arg9: memref<1x8xf32, #tpu.memory_space<vmem>>, %arg10: memref<8x16xf32, #tpu.memory_space<vmem>>, %arg11: memref<1x16xf32, #tpu.memory_space<vmem>>, %arg12: memref<16x32xf32, #tpu.memory_space<vmem>>, %arg13: memref<1x32xf32, #tpu.memory_space<vmem>>, %arg14: memref<32x128xf32, #tpu.memory_space<vmem>>, %arg15: memref<1x128xf32, #tpu.memory_space<vmem>>, %arg16: memref<1x128xf32, #tpu.memory_space<vmem>>) attributes {dimension_semantics = [#tpu.dimension_semantics<arbitrary>], iteration_bounds = array<i64: 4>, scalar_prefetch = 0 : i64, scratch_operands = 0 : i64, tpu.core_type = #tpu.core_type<tc>, window_params = [{transform_indices = @transform_0, window_bounds = array<i64: 64, 5>}, {pipeline_mode = #tpu.pipeline_mode<synchronous>, transform_indices = @transform_1, window_bounds = array<i64: 5, 16>}, {pipeline_mode = #tpu.pipeline_mode<synchronous>, transform_indices = @transform_2, window_bounds = array<i64: 1, 16>}, {pipeline_mode = #tpu.pipeline_mode<synchronous>, transform_indices = @transform_3, window_bounds = array<i64: 16, 8>}, {pipeline_mode = #tpu.pipeline_mode<synchronous>, transform_indices = @transform_4, window_bounds = array<i64: 1, 8>}, {pipeline_mode = #tpu.pipeline_mode<synchronous>, transform_indices = @transform_5, window_bounds = array<i64: 8, 4>}, {pipeline_mode = #tpu.pipeline_mode<synchronous>, transform_indices = @transform_6, window_bounds = array<i64: 1, 4>}, {pipeline_mode = #tpu.pipeline_mode<synchronous>, transform_indices = @transform_7, window_bounds = array<i64: 4, 8>}, {pipeline_mode = #tpu.pipeline_mode<synchronous>, transform_indices = @transform_8, window_bounds = array<i64: 1, 8>}, {pipeline_mode = #tpu.pipeline_mode<synchronous>, transform_indices = @transform_9, window_bounds = array<i64: 8, 16>}, {pipeline_mode = #tpu.pipeline_mode<synchronous>, transform_indices = @transform_10, window_bounds = array<i64: 1, 16>}, {pipeline_mode = #tpu.pipeline_mode<synchronous>, transform_indices = @transform_11, window_bounds = array<i64: 16, 32>}, {pipeline_mode = #tpu.pipeline_mode<synchronous>, transform_indices = @transform_12, window_bounds = array<i64: 1, 32>}, {pipeline_mode = #tpu.pipeline_mode<synchronous>, transform_indices = @transform_13, window_bounds = array<i64: 32, 128>}, {pipeline_mode = #tpu.pipeline_mode<synchronous>, transform_indices = @transform_14, window_bounds = array<i64: 1, 128>}, {pipeline_mode = #tpu.pipeline_mode<synchronous>, transform_indices = @transform_15, window_bounds = array<i64: 1, 128>}]} {
    %c0 = arith.constant 0 : index
    %c0_0 = arith.constant 0 : index
    %0 = vector.load %arg1[%c0, %c0_0] : memref<64x5xf32, #tpu.memory_space<vmem>>, vector<64x5xf32>
    %c0_1 = arith.constant 0 : index
    %c0_2 = arith.constant 0 : index
    %1 = vector.load %arg2[%c0_1, %c0_2] : memref<5x16xf32, #tpu.memory_space<vmem>>, vector<5x16xf32>
    %cst = arith.constant dense<0.000000e+00> : vector<64x16xf32>
    %2 = tpu.matmul %0, %1, %cst {dimension_numbers = #tpu.dot_dimension_numbers<[1], [0], [0], [1], [0, 0, 1, 1], [], []>} : vector<64x5xf32>, vector<5x16xf32>, vector<64x16xf32> -> vector<64x16xf32>
    %c0_3 = arith.constant 0 : index
    %c0_4 = arith.constant 0 : index
    %3 = vector.load %arg3[%c0_3, %c0_4] : memref<1x16xf32, #tpu.memory_space<vmem>>, vector<1x16xf32>
    %4 = vector.broadcast %3 : vector<1x16xf32> to vector<64x16xf32>
    %5 = arith.addf %2, %4 : vector<64x16xf32>
    %cst_5 = arith.constant 0.000000e+00 : f32
    %6 = vector.broadcast %cst_5 : f32 to vector<64x16xf32>
    %7 = arith.maximumf %5, %6 : vector<64x16xf32>
    %c0_6 = arith.constant 0 : index
    %c0_7 = arith.constant 0 : index
    %8 = vector.load %arg4[%c0_6, %c0_7] : memref<16x8xf32, #tpu.memory_space<vmem>>, vector<16x8xf32>
    %cst_8 = arith.constant dense<0.000000e+00> : vector<64x8xf32>
    %9 = tpu.matmul %7, %8, %cst_8 {dimension_numbers = #tpu.dot_dimension_numbers<[1], [0], [0], [1], [0, 0, 1, 1], [], []>} : vector<64x16xf32>, vector<16x8xf32>, vector<64x8xf32> -> vector<64x8xf32>
    %c0_9 = arith.constant 0 : index
    %c0_10 = arith.constant 0 : index
    %10 = vector.load %arg5[%c0_9, %c0_10] : memref<1x8xf32, #tpu.memory_space<vmem>>, vector<1x8xf32>
    %11 = vector.broadcast %10 : vector<1x8xf32> to vector<64x8xf32>
    %12 = arith.addf %9, %11 : vector<64x8xf32>
    %c0_11 = arith.constant 0 : index
    %c0_12 = arith.constant 0 : index
    %13 = vector.load %arg6[%c0_11, %c0_12] : memref<8x4xf32, #tpu.memory_space<vmem>>, vector<8x4xf32>
    %cst_13 = arith.constant dense<0.000000e+00> : vector<64x4xf32>
    %14 = tpu.matmul %12, %13, %cst_13 {dimension_numbers = #tpu.dot_dimension_numbers<[1], [0], [0], [1], [0, 0, 1, 1], [], []>} : vector<64x8xf32>, vector<8x4xf32>, vector<64x4xf32> -> vector<64x4xf32>
    %c0_14 = arith.constant 0 : index
    %c0_15 = arith.constant 0 : index
    %15 = vector.load %arg7[%c0_14, %c0_15] : memref<1x4xf32, #tpu.memory_space<vmem>>, vector<1x4xf32>
    %16 = vector.broadcast %15 : vector<1x4xf32> to vector<64x4xf32>
    %17 = arith.addf %14, %16 : vector<64x4xf32>
    %cst_16 = arith.constant 0.000000e+00 : f32
    %18 = vector.broadcast %cst_16 : f32 to vector<64x4xf32>
    %19 = arith.maximumf %17, %18 : vector<64x4xf32>
    %c0_17 = arith.constant 0 : index
    %c0_18 = arith.constant 0 : index
    %20 = vector.load %arg8[%c0_17, %c0_18] : memref<4x8xf32, #tpu.memory_space<vmem>>, vector<4x8xf32>
    %cst_19 = arith.constant dense<0.000000e+00> : vector<64x8xf32>
    %21 = tpu.matmul %19, %20, %cst_19 {dimension_numbers = #tpu.dot_dimension_numbers<[1], [0], [0], [1], [0, 0, 1, 1], [], []>} : vector<64x4xf32>, vector<4x8xf32>, vector<64x8xf32> -> vector<64x8xf32>
    %c0_20 = arith.constant 0 : index
    %c0_21 = arith.constant 0 : index
    %22 = vector.load %arg9[%c0_20, %c0_21] : memref<1x8xf32, #tpu.memory_space<vmem>>, vector<1x8xf32>
    %23 = vector.broadcast %22 : vector<1x8xf32> to vector<64x8xf32>
    %24 = arith.addf %21, %23 : vector<64x8xf32>
    %c0_22 = arith.constant 0 : index
    %c0_23 = arith.constant 0 : index
    %25 = vector.load %arg10[%c0_22, %c0_23] : memref<8x16xf32, #tpu.memory_space<vmem>>, vector<8x16xf32>
    %cst_24 = arith.constant dense<0.000000e+00> : vector<64x16xf32>
    %26 = tpu.matmul %24, %25, %cst_24 {dimension_numbers = #tpu.dot_dimension_numbers<[1], [0], [0], [1], [0, 0, 1, 1], [], []>} : vector<64x8xf32>, vector<8x16xf32>, vector<64x16xf32> -> vector<64x16xf32>
    %c0_25 = arith.constant 0 : index
    %c0_26 = arith.constant 0 : index
    %27 = vector.load %arg11[%c0_25, %c0_26] : memref<1x16xf32, #tpu.memory_space<vmem>>, vector<1x16xf32>
    %28 = vector.broadcast %27 : vector<1x16xf32> to vector<64x16xf32>
    %29 = arith.addf %26, %28 : vector<64x16xf32>
    %cst_27 = arith.constant 0.000000e+00 : f32
    %30 = vector.broadcast %cst_27 : f32 to vector<64x16xf32>
    %31 = arith.maximumf %29, %30 : vector<64x16xf32>
    %c0_28 = arith.constant 0 : index
    %c0_29 = arith.constant 0 : index
    %32 = vector.load %arg12[%c0_28, %c0_29] : memref<16x32xf32, #tpu.memory_space<vmem>>, vector<16x32xf32>
    %cst_30 = arith.constant dense<0.000000e+00> : vector<64x32xf32>
    %33 = tpu.matmul %31, %32, %cst_30 {dimension_numbers = #tpu.dot_dimension_numbers<[1], [0], [0], [1], [0, 0, 1, 1], [], []>} : vector<64x16xf32>, vector<16x32xf32>, vector<64x32xf32> -> vector<64x32xf32>
    %c0_31 = arith.constant 0 : index
    %c0_32 = arith.constant 0 : index
    %34 = vector.load %arg13[%c0_31, %c0_32] : memref<1x32xf32, #tpu.memory_space<vmem>>, vector<1x32xf32>
    %35 = vector.broadcast %34 : vector<1x32xf32> to vector<64x32xf32>
    %36 = arith.addf %33, %35 : vector<64x32xf32>
    %cst_33 = arith.constant 0.000000e+00 : f32
    %37 = vector.broadcast %cst_33 : f32 to vector<64x32xf32>
    %38 = arith.maximumf %36, %37 : vector<64x32xf32>
    %c0_34 = arith.constant 0 : index
    %c0_35 = arith.constant 0 : index
    %39 = vector.load %arg14[%c0_34, %c0_35] : memref<32x128xf32, #tpu.memory_space<vmem>>, vector<32x128xf32>
    %cst_36 = arith.constant dense<0.000000e+00> : vector<64x128xf32>
    %40 = tpu.matmul %38, %39, %cst_36 {dimension_numbers = #tpu.dot_dimension_numbers<[1], [0], [0], [1], [0, 0, 1, 1], [], []>} : vector<64x32xf32>, vector<32x128xf32>, vector<64x128xf32> -> vector<64x128xf32>
    %c0_37 = arith.constant 0 : index
    %c0_38 = arith.constant 0 : index
    %41 = vector.load %arg15[%c0_37, %c0_38] : memref<1x128xf32, #tpu.memory_space<vmem>>, vector<1x128xf32>
    %42 = vector.broadcast %41 : vector<1x128xf32> to vector<64x128xf32>
    %43 = arith.addf %40, %42 : vector<64x128xf32>
    %cst_39 = arith.constant dense<0xFF800000> : vector<128xf32>
    %44 = vector.multi_reduction <maximumf>, %43, %cst_39 [0] : vector<64x128xf32> to vector<128xf32>
    %45 = vector.shape_cast %44 : vector<128xf32> to vector<1x128xf32>
    %c0_i32 = arith.constant 0 : i32
    %46 = arith.cmpi eq, %arg0, %c0_i32 : i32
    %47 = arith.extui %46 : i1 to i32
    %c0_i32_40 = arith.constant 0 : i32
    %48 = arith.cmpi ne, %47, %c0_i32_40 : i32
    scf.if %48 {
      %c0_43 = arith.constant 0 : index
      %c0_44 = arith.constant 0 : index
      %52 = vector.load %arg16[%c0_43, %c0_44] : memref<1x128xf32, #tpu.memory_space<vmem>>, vector<1x128xf32>
      tpu.vector_store %arg16[%c0_43, %c0_44], %45 {strides = array<i32>} : memref<1x128xf32, #tpu.memory_space<vmem>>, vector<1x128xf32>,
    } else {
    }
    %c0_i32_41 = arith.constant 0 : i32
    %49 = arith.cmpi ne, %arg0, %c0_i32_41 : i32
    %50 = arith.extui %49 : i1 to i32
    %c0_i32_42 = arith.constant 0 : i32
    %51 = arith.cmpi ne, %50, %c0_i32_42 : i32
    scf.if %51 {
      %c0_43 = arith.constant 0 : index
      %c0_44 = arith.constant 0 : index
      %52 = vector.load %arg16[%c0_43, %c0_44] : memref<1x128xf32, #tpu.memory_space<vmem>>, vector<1x128xf32>
      %53 = arith.maximumf %52, %45 : vector<1x128xf32>
      %c0_45 = arith.constant 0 : index
      %c0_46 = arith.constant 0 : index
      %54 = vector.load %arg16[%c0_45, %c0_46] : memref<1x128xf32, #tpu.memory_space<vmem>>, vector<1x128xf32>
      tpu.vector_store %arg16[%c0_45, %c0_46], %53 {strides = array<i32>} : memref<1x128xf32, #tpu.memory_space<vmem>>, vector<1x128xf32>,
    } else {
    }
    return
  }
  func.func @transform_0(%arg0: i32) -> (i32, i32) {
    %c0_i32 = arith.constant 0 : i32
    %c0_i32_0 = arith.constant 0 : i32
    return %arg0, %c0_i32 : i32, i32
  }
  func.func @transform_1(%arg0: i32) -> (i32, i32) {
    %c0_i32 = arith.constant 0 : i32
    %c0_i32_0 = arith.constant 0 : i32
    %c0_i32_1 = arith.constant 0 : i32
    return %c0_i32, %c0_i32_0 : i32, i32
  }
  func.func @transform_2(%arg0: i32) -> (i32, i32) {
    %c0_i32 = arith.constant 0 : i32
    %c0_i32_0 = arith.constant 0 : i32
    %c0_i32_1 = arith.constant 0 : i32
    return %c0_i32, %c0_i32_0 : i32, i32
  }
  func.func @transform_3(%arg0: i32) -> (i32, i32) {
    %c0_i32 = arith.constant 0 : i32
    %c0_i32_0 = arith.constant 0 : i32
    %c0_i32_1 = arith.constant 0 : i32
    return %c0_i32, %c0_i32_0 : i32, i32
  }
  func.func @transform_4(%arg0: i32) -> (i32, i32) {
    %c0_i32 = arith.constant 0 : i32
    %c0_i32_0 = arith.constant 0 : i32
    %c0_i32_1 = arith.constant 0 : i32
    return %c0_i32, %c0_i32_0 : i32, i32
  }
  func.func @transform_5(%arg0: i32) -> (i32, i32) {
    %c0_i32 = arith.constant 0 : i32
    %c0_i32_0 = arith.constant 0 : i32
    %c0_i32_1 = arith.constant 0 : i32
    return %c0_i32, %c0_i32_0 : i32, i32
  }
  func.func @transform_6(%arg0: i32) -> (i32, i32) {
    %c0_i32 = arith.constant 0 : i32
    %c0_i32_0 = arith.constant 0 : i32
    %c0_i32_1 = arith.constant 0 : i32
    return %c0_i32, %c0_i32_0 : i32, i32
  }
  func.func @transform_7(%arg0: i32) -> (i32, i32) {
    %c0_i32 = arith.constant 0 : i32
    %c0_i32_0 = arith.constant 0 : i32
    %c0_i32_1 = arith.constant 0 : i32
    return %c0_i32, %c0_i32_0 : i32, i32
  }
  func.func @transform_8(%arg0: i32) -> (i32, i32) {
    %c0_i32 = arith.constant 0 : i32
    %c0_i32_0 = arith.constant 0 : i32
    %c0_i32_1 = arith.constant 0 : i32
    return %c0_i32, %c0_i32_0 : i32, i32
  }
  func.func @transform_9(%arg0: i32) -> (i32, i32) {
    %c0_i32 = arith.constant 0 : i32
    %c0_i32_0 = arith.constant 0 : i32
    %c0_i32_1 = arith.constant 0 : i32
    return %c0_i32, %c0_i32_0 : i32, i32
  }
  func.func @transform_10(%arg0: i32) -> (i32, i32) {
    %c0_i32 = arith.constant 0 : i32
    %c0_i32_0 = arith.constant 0 : i32
    %c0_i32_1 = arith.constant 0 : i32
    return %c0_i32, %c0_i32_0 : i32, i32
  }
  func.func @transform_11(%arg0: i32) -> (i32, i32) {
    %c0_i32 = arith.constant 0 : i32
    %c0_i32_0 = arith.constant 0 : i32
    %c0_i32_1 = arith.constant 0 : i32
    return %c0_i32, %c0_i32_0 : i32, i32
  }
  func.func @transform_12(%arg0: i32) -> (i32, i32) {
    %c0_i32 = arith.constant 0 : i32
    %c0_i32_0 = arith.constant 0 : i32
    %c0_i32_1 = arith.constant 0 : i32
    return %c0_i32, %c0_i32_0 : i32, i32
  }
  func.func @transform_13(%arg0: i32) -> (i32, i32) {
    %c0_i32 = arith.constant 0 : i32
    %c0_i32_0 = arith.constant 0 : i32
    %c0_i32_1 = arith.constant 0 : i32
    return %c0_i32, %c0_i32_0 : i32, i32
  }
  func.func @transform_14(%arg0: i32) -> (i32, i32) {
    %c0_i32 = arith.constant 0 : i32
    %c0_i32_0 = arith.constant 0 : i32
    %c0_i32_1 = arith.constant 0 : i32
    return %c0_i32, %c0_i32_0 : i32, i32
  }
  func.func @transform_15(%arg0: i32) -> (i32, i32) {
    %c0_i32 = arith.constant 0 : i32
    %c0_i32_0 = arith.constant 0 : i32
    %c0_i32_1 = arith.constant 0 : i32
    return %c0_i32, %c0_i32_0 : i32, i32
  }
}

</mosaic_0001>

<llo_original>
// kernel: tpu_custom_call.1
$region0: #{tpu_custom_call.1}
  #allocation0 [shape = 'u32[]', space=smem, size = 0x4, offset = 0x4, fixed_abs, tag = 'smem constant byte address 0x4 - core index']
  #allocation1 [shape = 'u32[144,128]{1,0:T(1,128)}', space=vmem, size = 0x12000, scoped, tag = 'internal scratch']
  %s0 = inlined_call_operand.vmem [shape: f32[256,5], index: 0, kind: input, shape index: {}]
  %s1 = inlined_call_operand.vmem [shape: f32[5,16], index: 1, kind: input, shape index: {}]
  %s2 = inlined_call_operand.vmem [shape: f32[1,16], index: 2, kind: input, shape index: {}]
  %s3 = inlined_call_operand.vmem [shape: f32[16,8], index: 3, kind: input, shape index: {}]
  %s4 = inlined_call_operand.vmem [shape: f32[1,8], index: 4, kind: input, shape index: {}]
  %s5 = inlined_call_operand.vmem [shape: f32[8,4], index: 5, kind: input, shape index: {}]
  %s6 = inlined_call_operand.vmem [shape: f32[1,4], index: 6, kind: input, shape index: {}]
  %s7 = inlined_call_operand.vmem [shape: f32[4,8], index: 7, kind: input, shape index: {}]
  %s8 = inlined_call_operand.vmem [shape: f32[1,8], index: 8, kind: input, shape index: {}]
  %s9 = inlined_call_operand.vmem [shape: f32[8,16], index: 9, kind: input, shape index: {}]
  %s10 = inlined_call_operand.vmem [shape: f32[1,16], index: 10, kind: input, shape index: {}]
  %s11 = inlined_call_operand.vmem [shape: f32[16,32], index: 11, kind: input, shape index: {}]
  %s12 = inlined_call_operand.vmem [shape: f32[1,32], index: 12, kind: input, shape index: {}]
  %s13 = inlined_call_operand.vmem [shape: f32[32,128], index: 13, kind: input, shape index: {}]
  %s14 = inlined_call_operand.vmem [shape: f32[1,128], index: 14, kind: input, shape index: {}]
  %s15 = inlined_call_operand.hbm [shape: f32[1,128], index: 15, kind: output, shape index: {}]
  %s16 = sld [smem:[#allocation0]]
  $region101: #{tpu_custom_call.1} parent=0
    _
  %s18 = ssub.s32 1, %s16
  %s19 = scalar_select 0, %s18, %s16
  $region1: #{tpu_custom_call.1} parent=0
    #allocation2 [shape = 'u8[512]{0}', space=vmem, size = 0x400, scoped, tag = 'output window, operand 0, single buffered']
    #allocation3 [shape = 's32[2]{0}', space=sflag, size = 0x8, scoped, tag = 'scoped memory for tpu_custom_call.1']
    %20 = vsyncpa [#allocation3], 0
    loop: start=0, step=1, limit=6
    $region2: #{tpu_custom_call.1} parent=1 // loop_pre_header
      _
    $region3: #{tpu_custom_call.1} parent=1 // loop_header
      %s22 = sphi 0, %s26
      %p23 = scmp.ge.s32.totalorder %s22, 6
      %s32 = sphi 0, %s34
      %s35 = sphi 0, %s32
      %s36 = sphi 0, %s35
      %s52 = sphi 0, %s36
      %s56 = sphi 0, %s56
      %s58 = sphi 0, %s56
      %s59 = sphi 0, %s58
      %s73 = sphi 0, %s59
      %s77 = sphi 0, %s77
      %s79 = sphi 0, %s77
      %s80 = sphi 0, %s79
      %s94 = sphi 0, %s80
      %s98 = sphi 0, %s98
      %s100 = sphi 0, %s98
      %s101 = sphi 0, %s100
      %s115 = sphi 0, %s101
      %s119 = sphi 0, %s119
      %s121 = sphi 0, %s119
      %s122 = sphi 0, %s121
      %s136 = sphi 0, %s122
      %s140 = sphi 0, %s140
      %s142 = sphi 0, %s140
      %s143 = sphi 0, %s142
      %s157 = sphi 0, %s143
      %s161 = sphi 0, %s161
      %s163 = sphi 0, %s161
      %s164 = sphi 0, %s163
      %s178 = sphi 0, %s164
      %s182 = sphi 0, %s182
      %s184 = sphi 0, %s182
      %s185 = sphi 0, %s184
      %s199 = sphi 0, %s185
      %s203 = sphi 0, %s203
      %s205 = sphi 0, %s203
      %s206 = sphi 0, %s205
      %s220 = sphi 0, %s206
      %s224 = sphi 0, %s224
      %s226 = sphi 0, %s224
      %s227 = sphi 0, %s226
      %s241 = sphi 0, %s227
      %s245 = sphi 0, %s245
      %s247 = sphi 0, %s245
      %s248 = sphi 0, %s247
      %s262 = sphi 0, %s248
      %s266 = sphi 0, %s266
      %s268 = sphi 0, %s266
      %s269 = sphi 0, %s268
      %s283 = sphi 0, %s269
      %s287 = sphi 0, %s287
      %s289 = sphi 0, %s287
      %s290 = sphi 0, %s289
      %s304 = sphi 0, %s290
      %s308 = sphi 0, %s308
      %s310 = sphi 0, %s308
      %s311 = sphi 0, %s310
      %s325 = sphi 0, %s311
      %s329 = sphi 0, %s329
      %s331 = sphi 0, %s329
      %s332 = sphi 0, %s331
      %s346 = sphi 0, %s332
      %s350 = sphi 0, %s350
      %s352 = sphi 0, %s350
      %s353 = sphi 0, %s352
      %s367 = sphi 0, %s353
    $region4: #{tpu_custom_call.1} parent=1 // loop_header_branch
      %25 = sbr.rel (%p23) target = $region8
    $region5: #{tpu_custom_call.1} parent=1 // loop_body
      %s27 = ssub.s32 %s22, 1
      %s28 = ssub.s32 %s22, 2
      %s29 = sadd.s32 %s22, 1
      %s30 = ssub.s32 %s22, %s29
      %p31 = scmp.eq.s32.totalorder %s30, 0
      %s33 = sadd.s32 %s32, 1
      %s34 = scalar_select %p31, %s32, %s33
      %p37 = pneg %p31
      %p38 = scmp.eq.s32.totalorder %s22, 3
      %p39 = por %p37, %p38
      %p40 = scmp.ne.s32.totalorder %s32, %s35
      %p41 = scmp.eq.s32.totalorder %s22, 0
      %p42 = por %p40, %p41
      %p43 = scmp.ne.s32.totalorder %s32, %s35
      %p44 = scmp.eq.s32.totalorder %s27, 3
      %p45 = por %p43, %p44
      %p46 = scmp.ne.s32.totalorder %s35, %s36
      %p47 = scmp.eq.s32.totalorder %s27, 0
      %p48 = por %p46, %p47
      %p49 = scmp.ne.s32.totalorder %s35, %s36
      %p50 = scmp.eq.s32.totalorder %s28, 3
      %p51 = por %p49, %p50
      %p53 = scmp.ne.s32.totalorder %s36, %s52
      %p54 = scmp.eq.s32.totalorder %s28, 0
      %p55 = por %p53, %p54
      %s57 = sadd.s32 %s56, 1
      %p60 = scmp.eq.s32.totalorder %s22, 3
      %p61 = scmp.ne.s32.totalorder %s56, %s58
      %p62 = scmp.eq.s32.totalorder %s22, 0
      %p63 = por %p61, %p62
      %p64 = scmp.ne.s32.totalorder %s56, %s58
      %p65 = scmp.eq.s32.totalorder %s27, 3
      %p66 = por %p64, %p65
      %p67 = scmp.ne.s32.totalorder %s58, %s59
      %p68 = scmp.eq.s32.totalorder %s27, 0
      %p69 = por %p67, %p68
      %p70 = scmp.ne.s32.totalorder %s58, %s59
      %p71 = scmp.eq.s32.totalorder %s28, 3
      %p72 = por %p70, %p71
      %p74 = scmp.ne.s32.totalorder %s59, %s73
      %p75 = scmp.eq.s32.totalorder %s28, 0
      %p76 = por %p74, %p75
      %s78 = sadd.s32 %s77, 1
      %p81 = scmp.eq.s32.totalorder %s22, 3
      %p82 = scmp.ne.s32.totalorder %s77, %s79
      %p83 = scmp.eq.s32.totalorder %s22, 0
      %p84 = por %p82, %p83
      %p85 = scmp.ne.s32.totalorder %s77, %s79
      %p86 = scmp.eq.s32.totalorder %s27, 3
      %p87 = por %p85, %p86
      %p88 = scmp.ne.s32.totalorder %s79, %s80
      %p89 = scmp.eq.s32.totalorder %s27, 0
      %p90 = por %p88, %p89
      %p91 = scmp.ne.s32.totalorder %s79, %s80
      %p92 = scmp.eq.s32.totalorder %s28, 3
      %p93 = por %p91, %p92
      %p95 = scmp.ne.s32.totalorder %s80, %s94
      %p96 = scmp.eq.s32.totalorder %s28, 0
      %p97 = por %p95, %p96
      %s99 = sadd.s32 %s98, 1
      %p102 = scmp.eq.s32.totalorder %s22, 3
      %p103 = scmp.ne.s32.totalorder %s98, %s100
      %p104 = scmp.eq.s32.totalorder %s22, 0
      %p105 = por %p103, %p104
      %p106 = scmp.ne.s32.totalorder %s98, %s100
      %p107 = scmp.eq.s32.totalorder %s27, 3
      %p108 = por %p106, %p107
      %p109 = scmp.ne.s32.totalorder %s100, %s101
      %p110 = scmp.eq.s32.totalorder %s27, 0
      %p111 = por %p109, %p110
      %p112 = scmp.ne.s32.totalorder %s100, %s101
      %p113 = scmp.eq.s32.totalorder %s28, 3
      %p114 = por %p112, %p113
      %p116 = scmp.ne.s32.totalorder %s101, %s115
      %p117 = scmp.eq.s32.totalorder %s28, 0
      %p118 = por %p116, %p117
      %s120 = sadd.s32 %s119, 1
      %p123 = scmp.eq.s32.totalorder %s22, 3
      %p124 = scmp.ne.s32.totalorder %s119, %s121
      %p125 = scmp.eq.s32.totalorder %s22, 0
      %p126 = por %p124, %p125
      %p127 = scmp.ne.s32.totalorder %s119, %s121
      %p128 = scmp.eq.s32.totalorder %s27, 3
      %p129 = por %p127, %p128
      %p130 = scmp.ne.s32.totalorder %s121, %s122
      %p131 = scmp.eq.s32.totalorder %s27, 0
      %p132 = por %p130, %p131
      %p133 = scmp.ne.s32.totalorder %s121, %s122
      %p134 = scmp.eq.s32.totalorder %s28, 3
      %p135 = por %p133, %p134
      %p137 = scmp.ne.s32.totalorder %s122, %s136
      %p138 = scmp.eq.s32.totalorder %s28, 0
      %p139 = por %p137, %p138
      %s141 = sadd.s32 %s140, 1
      %p144 = scmp.eq.s32.totalorder %s22, 3
      %p145 = scmp.ne.s32.totalorder %s140, %s142
      %p146 = scmp.eq.s32.totalorder %s22, 0
      %p147 = por %p145, %p146
      %p148 = scmp.ne.s32.totalorder %s140, %s142
      %p149 = scmp.eq.s32.totalorder %s27, 3
      %p150 = por %p148, %p149
      %p151 = scmp.ne.s32.totalorder %s142, %s143
      %p152 = scmp.eq.s32.totalorder %s27, 0
      %p153 = por %p151, %p152
      %p154 = scmp.ne.s32.totalorder %s142, %s143
      %p155 = scmp.eq.s32.totalorder %s28, 3
      %p156 = por %p154, %p155
      %p158 = scmp.ne.s32.totalorder %s143, %s157
      %p159 = scmp.eq.s32.totalorder %s28, 0
      %p160 = por %p158, %p159
      %s162 = sadd.s32 %s161, 1
      %p165 = scmp.eq.s32.totalorder %s22, 3
      %p166 = scmp.ne.s32.totalorder %s161, %s163
      %p167 = scmp.eq.s32.totalorder %s22, 0
      %p168 = por %p166, %p167
      %p169 = scmp.ne.s32.totalorder %s161, %s163
      %p170 = scmp.eq.s32.totalorder %s27, 3
      %p171 = por %p169, %p170
      %p172 = scmp.ne.s32.totalorder %s163, %s164
      %p173 = scmp.eq.s32.totalorder %s27, 0
      %p174 = por %p172, %p173
      %p175 = scmp.ne.s32.totalorder %s163, %s164
      %p176 = scmp.eq.s32.totalorder %s28, 3
      %p177 = por %p175, %p176
      %p179 = scmp.ne.s32.totalorder %s164, %s178
      %p180 = scmp.eq.s32.totalorder %s28, 0
      %p181 = por %p179, %p180
      %s183 = sadd.s32 %s182, 1
      %p186 = scmp.eq.s32.totalorder %s22, 3
      %p187 = scmp.ne.s32.totalorder %s182, %s184
      %p188 = scmp.eq.s32.totalorder %s22, 0
      %p189 = por %p187, %p188
      %p190 = scmp.ne.s32.totalorder %s182, %s184
      %p191 = scmp.eq.s32.totalorder %s27, 3
      %p192 = por %p190, %p191
      %p193 = scmp.ne.s32.totalorder %s184, %s185
      %p194 = scmp.eq.s32.totalorder %s27, 0
      %p195 = por %p193, %p194
      %p196 = scmp.ne.s32.totalorder %s184, %s185
      %p197 = scmp.eq.s32.totalorder %s28, 3
      %p198 = por %p196, %p197
      %p200 = scmp.ne.s32.totalorder %s185, %s199
      %p201 = scmp.eq.s32.totalorder %s28, 0
      %p202 = por %p200, %p201
      %s204 = sadd.s32 %s203, 1
      %p207 = scmp.eq.s32.totalorder %s22, 3
      %p208 = scmp.ne.s32.totalorder %s203, %s205
      %p209 = scmp.eq.s32.totalorder %s22, 0
      %p210 = por %p208, %p209
      %p211 = scmp.ne.s32.totalorder %s203, %s205
      %p212 = scmp.eq.s32.totalorder %s27, 3
      %p213 = por %p211, %p212
      %p214 = scmp.ne.s32.totalorder %s205, %s206
      %p215 = scmp.eq.s32.totalorder %s27, 0
      %p216 = por %p214, %p215
      %p217 = scmp.ne.s32.totalorder %s205, %s206
      %p218 = scmp.eq.s32.totalorder %s28, 3
      %p219 = por %p217, %p218
      %p221 = scmp.ne.s32.totalorder %s206, %s220
      %p222 = scmp.eq.s32.totalorder %s28, 0
      %p223 = por %p221, %p222
      %s225 = sadd.s32 %s224, 1
      %p228 = scmp.eq.s32.totalorder %s22, 3
      %p229 = scmp.ne.s32.totalorder %s224, %s226
      %p230 = scmp.eq.s32.totalorder %s22, 0
      %p231 = por %p229, %p230
      %p232 = scmp.ne.s32.totalorder %s224, %s226
      %p233 = scmp.eq.s32.totalorder %s27, 3
      %p234 = por %p232, %p233
      %p235 = scmp.ne.s32.totalorder %s226, %s227
      %p236 = scmp.eq.s32.totalorder %s27, 0
      %p237 = por %p235, %p236
      %p238 = scmp.ne.s32.totalorder %s226, %s227
      %p239 = scmp.eq.s32.totalorder %s28, 3
      %p240 = por %p238, %p239
      %p242 = scmp.ne.s32.totalorder %s227, %s241
      %p243 = scmp.eq.s32.totalorder %s28, 0
      %p244 = por %p242, %p243
      %s246 = sadd.s32 %s245, 1
      %p249 = scmp.eq.s32.totalorder %s22, 3
      %p250 = scmp.ne.s32.totalorder %s245, %s247
      %p251 = scmp.eq.s32.totalorder %s22, 0
      %p252 = por %p250, %p251
      %p253 = scmp.ne.s32.totalorder %s245, %s247
      %p254 = scmp.eq.s32.totalorder %s27, 3
      %p255 = por %p253, %p254
      %p256 = scmp.ne.s32.totalorder %s247, %s248
      %p257 = scmp.eq.s32.totalorder %s27, 0
      %p258 = por %p256, %p257
      %p259 = scmp.ne.s32.totalorder %s247, %s248
      %p260 = scmp.eq.s32.totalorder %s28, 3
      %p261 = por %p259, %p260
      %p263 = scmp.ne.s32.totalorder %s248, %s262
      %p264 = scmp.eq.s32.totalorder %s28, 0
      %p265 = por %p263, %p264
      %s267 = sadd.s32 %s266, 1
      %p270 = scmp.eq.s32.totalorder %s22, 3
      %p271 = scmp.ne.s32.totalorder %s266, %s268
      %p272 = scmp.eq.s32.totalorder %s22, 0
      %p273 = por %p271, %p272
      %p274 = scmp.ne.s32.totalorder %s266, %s268
      %p275 = scmp.eq.s32.totalorder %s27, 3
      %p276 = por %p274, %p275
      %p277 = scmp.ne.s32.totalorder %s268, %s269
      %p278 = scmp.eq.s32.totalorder %s27, 0
      %p279 = por %p277, %p278
      %p280 = scmp.ne.s32.totalorder %s268, %s269
      %p281 = scmp.eq.s32.totalorder %s28, 3
      %p282 = por %p280, %p281
      %p284 = scmp.ne.s32.totalorder %s269, %s283
      %p285 = scmp.eq.s32.totalorder %s28, 0
      %p286 = por %p284, %p285
      %s288 = sadd.s32 %s287, 1
      %p291 = scmp.eq.s32.totalorder %s22, 3
      %p292 = scmp.ne.s32.totalorder %s287, %s289
      %p293 = scmp.eq.s32.totalorder %s22, 0
      %p294 = por %p292, %p293
      %p295 = scmp.ne.s32.totalorder %s287, %s289
      %p296 = scmp.eq.s32.totalorder %s27, 3
      %p297 = por %p295, %p296
      %p298 = scmp.ne.s32.totalorder %s289, %s290
      %p299 = scmp.eq.s32.totalorder %s27, 0
      %p300 = por %p298, %p299
      %p301 = scmp.ne.s32.totalorder %s289, %s290
      %p302 = scmp.eq.s32.totalorder %s28, 3
      %p303 = por %p301, %p302
      %p305 = scmp.ne.s32.totalorder %s290, %s304
      %p306 = scmp.eq.s32.totalorder %s28, 0
      %p307 = por %p305, %p306
      %s309 = sadd.s32 %s308, 1
      %p312 = scmp.eq.s32.totalorder %s22, 3
      %p313 = scmp.ne.s32.totalorder %s308, %s310
      %p314 = scmp.eq.s32.totalorder %s22, 0
      %p315 = por %p313, %p314
      %p316 = scmp.ne.s32.totalorder %s308, %s310
      %p317 = scmp.eq.s32.totalorder %s27, 3
      %p318 = por %p316, %p317
      %p319 = scmp.ne.s32.totalorder %s310, %s311
      %p320 = scmp.eq.s32.totalorder %s27, 0
      %p321 = por %p319, %p320
      %p322 = scmp.ne.s32.totalorder %s310, %s311
      %p323 = scmp.eq.s32.totalorder %s28, 3
      %p324 = por %p322, %p323
      %p326 = scmp.ne.s32.totalorder %s311, %s325
      %p327 = scmp.eq.s32.totalorder %s28, 0
      %p328 = por %p326, %p327
      %s330 = sadd.s32 %s329, 1
      %p333 = scmp.eq.s32.totalorder %s22, 3
      %p334 = scmp.ne.s32.totalorder %s329, %s331
      %p335 = scmp.eq.s32.totalorder %s22, 0
      %p336 = por %p334, %p335
      %p337 = scmp.ne.s32.totalorder %s329, %s331
      %p338 = scmp.eq.s32.totalorder %s27, 3
      %p339 = por %p337, %p338
      %p340 = scmp.ne.s32.totalorder %s331, %s332
      %p341 = scmp.eq.s32.totalorder %s27, 0
      %p342 = por %p340, %p341
      %p343 = scmp.ne.s32.totalorder %s331, %s332
      %p344 = scmp.eq.s32.totalorder %s28, 3
      %p345 = por %p343, %p344
      %p347 = scmp.ne.s32.totalorder %s332, %s346
      %p348 = scmp.eq.s32.totalorder %s28, 0
      %p349 = por %p347, %p348
      %s351 = sadd.s32 %s350, 1
      %p354 = scmp.eq.s32.totalorder %s22, 3
      %p355 = scmp.ne.s32.totalorder %s350, %s352
      %p356 = scmp.eq.s32.totalorder %s22, 0
      %p357 = por %p355, %p356
      %p358 = scmp.ne.s32.totalorder %s350, %s352
      %p359 = scmp.eq.s32.totalorder %s27, 3
      %p360 = por %p358, %p359
      %p361 = scmp.ne.s32.totalorder %s352, %s353
      %p362 = scmp.eq.s32.totalorder %s27, 0
      %p363 = por %p361, %p362
      %p364 = scmp.ne.s32.totalorder %s352, %s353
      %p365 = scmp.eq.s32.totalorder %s28, 3
      %p366 = por %p364, %p365
      %p368 = scmp.ne.s32.totalorder %s353, %s367
      %p369 = scmp.eq.s32.totalorder %s28, 0
      %p370 = por %p368, %p369
      %p371 = scmp.le.s32.totalorder 1, %s22
      %p372 = scmp.lt.s32.totalorder %s22, 5
      %p373 = pnand %p371, %p372
      %p374 = pneg %p373
      // Predicated region
      $region9: #{tpu_custom_call.1} parent=5 // pred_check
        _
      $region10: #{tpu_custom_call.1} parent=5 // pred_check_branch
        %376 = sbr.rel (%p373) target = $region12
      $region11: #{tpu_custom_call.1} parent=5 // pred_region
        %s377 = ssub.s32 %s22, 1
        // Predicated region
        $region13: #{tpu_custom_call.1} parent=11 // pred_check
          %p378 = pneg %p69
        $region14: #{tpu_custom_call.1} parent=11 // pred_check_branch
          %380 = sbr.rel (%p378) target = $region16
        $region15: #{tpu_custom_call.1} parent=11 // pred_region
          _
        $region16: #{tpu_custom_call.1} parent=11 // pred_fallthru
          _
        // Predicated region
        $region17: #{tpu_custom_call.1} parent=11 // pred_check
          %p381 = pneg %p90
        $region18: #{tpu_custom_call.1} parent=11 // pred_check_branch
          %383 = sbr.rel (%p381) target = $region20
        $region19: #{tpu_custom_call.1} parent=11 // pred_region
          _
        $region20: #{tpu_custom_call.1} parent=11 // pred_fallthru
          _
        // Predicated region
        $region21: #{tpu_custom_call.1} parent=11 // pred_check
          %p384 = pneg %p111
        $region22: #{tpu_custom_call.1} parent=11 // pred_check_branch
          %386 = sbr.rel (%p384) target = $region24
        $region23: #{tpu_custom_call.1} parent=11 // pred_region
          _
        $region24: #{tpu_custom_call.1} parent=11 // pred_fallthru
          _
        // Predicated region
        $region25: #{tpu_custom_call.1} parent=11 // pred_check
          %p387 = pneg %p132
        $region26: #{tpu_custom_call.1} parent=11 // pred_check_branch
          %389 = sbr.rel (%p387) target = $region28
        $region27: #{tpu_custom_call.1} parent=11 // pred_region
          _
        $region28: #{tpu_custom_call.1} parent=11 // pred_fallthru
          _
        // Predicated region
        $region29: #{tpu_custom_call.1} parent=11 // pred_check
          %p390 = pneg %p153
        $region30: #{tpu_custom_call.1} parent=11 // pred_check_branch
          %392 = sbr.rel (%p390) target = $region32
        $region31: #{tpu_custom_call.1} parent=11 // pred_region
          _
        $region32: #{tpu_custom_call.1} parent=11 // pred_fallthru
          _
        // Predicated region
        $region33: #{tpu_custom_call.1} parent=11 // pred_check
          %p393 = pneg %p174
        $region34: #{tpu_custom_call.1} parent=11 // pred_check_branch
          %395 = sbr.rel (%p393) target = $region36
        $region35: #{tpu_custom_call.1} parent=11 // pred_region
          _
        $region36: #{tpu_custom_call.1} parent=11 // pred_fallthru
          _
        // Predicated region
        $region37: #{tpu_custom_call.1} parent=11 // pred_check
          %p396 = pneg %p195
        $region38: #{tpu_custom_call.1} parent=11 // pred_check_branch
          %398 = sbr.rel (%p396) target = $region40
        $region39: #{tpu_custom_call.1} parent=11 // pred_region
          _
        $region40: #{tpu_custom_call.1} parent=11 // pred_fallthru
          _
        // Predicated region
        $region41: #{tpu_custom_call.1} parent=11 // pred_check
          %p399 = pneg %p216
        $region42: #{tpu_custom_call.1} parent=11 // pred_check_branch
          %401 = sbr.rel (%p399) target = $region44
        $region43: #{tpu_custom_call.1} parent=11 // pred_region
          _
        $region44: #{tpu_custom_call.1} parent=11 // pred_fallthru
          _
        // Predicated region
        $region45: #{tpu_custom_call.1} parent=11 // pred_check
          %p402 = pneg %p237
        $region46: #{tpu_custom_call.1} parent=11 // pred_check_branch
          %404 = sbr.rel (%p402) target = $region48
        $region47: #{tpu_custom_call.1} parent=11 // pred_region
          _
        $region48: #{tpu_custom_call.1} parent=11 // pred_fallthru
          _
        // Predicated region
        $region49: #{tpu_custom_call.1} parent=11 // pred_check
          %p405 = pneg %p258
        $region50: #{tpu_custom_call.1} parent=11 // pred_check_branch
          %407 = sbr.rel (%p405) target = $region52
        $region51: #{tpu_custom_call.1} parent=11 // pred_region
          _
        $region52: #{tpu_custom_call.1} parent=11 // pred_fallthru
          _
        // Predicated region
        $region53: #{tpu_custom_call.1} parent=11 // pred_check
          %p408 = pneg %p279
        $region54: #{tpu_custom_call.1} parent=11 // pred_check_branch
          %410 = sbr.rel (%p408) target = $region56
        $region55: #{tpu_custom_call.1} parent=11 // pred_region
          _
        $region56: #{tpu_custom_call.1} parent=11 // pred_fallthru
          _
        // Predicated region
        $region57: #{tpu_custom_call.1} parent=11 // pred_check
          %p411 = pneg %p300
        $region58: #{tpu_custom_call.1} parent=11 // pred_check_branch
          %413 = sbr.rel (%p411) target = $region60
        $region59: #{tpu_custom_call.1} parent=11 // pred_region
          _
        $region60: #{tpu_custom_call.1} parent=11 // pred_fallthru
          _
        // Predicated region
        $region61: #{tpu_custom_call.1} parent=11 // pred_check
          %p414 = pneg %p321
        $region62: #{tpu_custom_call.1} parent=11 // pred_check_branch
          %416 = sbr.rel (%p414) target = $region64
        $region63: #{tpu_custom_call.1} parent=11 // pred_region
          _
        $region64: #{tpu_custom_call.1} parent=11 // pred_fallthru
          _
        // Predicated region
        $region65: #{tpu_custom_call.1} parent=11 // pred_check
          %p417 = pneg %p342
        $region66: #{tpu_custom_call.1} parent=11 // pred_check_branch
          %419 = sbr.rel (%p417) target = $region68
        $region67: #{tpu_custom_call.1} parent=11 // pred_region
          _
        $region68: #{tpu_custom_call.1} parent=11 // pred_fallthru
          _
      $region12: #{tpu_custom_call.1} parent=5 // pred_fallthru
        _
      %p420 = scmp.lt.s32.totalorder %s22, 4
      // Predicated region
      $region69: #{tpu_custom_call.1} parent=5 // pred_check
        %p421 = pneg %p420
      $region70: #{tpu_custom_call.1} parent=5 // pred_check_branch
        %423 = sbr.rel (%p421) target = $region72
      $region71: #{tpu_custom_call.1} parent=5 // pred_region
        // Predicated region
        $region73: #{tpu_custom_call.1} parent=71 // pred_check
          %p424 = pneg %p42
        $region74: #{tpu_custom_call.1} parent=71 // pred_check_branch
          %426 = sbr.rel (%p424) target = $region76
        $region75: #{tpu_custom_call.1} parent=71 // pred_region
          %s427 = smul.u32 8, %s22
          %p428 = scmp.lt.s32.totalorder %s427, 31
          %s429 = scalar_select %p428, %s427, 31
          %s430 = smul.addr %s429, 8
          %s431 = scalar_lea.vmem %s0, %s430
          %s432 = smul.u32 8, %s22
        $region76: #{tpu_custom_call.1} parent=71 // pred_fallthru
          _
      $region72: #{tpu_custom_call.1} parent=5 // pred_fallthru
        _
      %p433 = scmp.le.s32.totalorder 1, %s22
      %p434 = scmp.lt.s32.totalorder %s22, 5
      %p435 = pnand %p433, %p434
      %p436 = pneg %p435
      // Predicated region
      $region77: #{tpu_custom_call.1} parent=5 // pred_check
        _
      $region78: #{tpu_custom_call.1} parent=5 // pred_check_branch
        %438 = sbr.rel (%p435) target = $region80
      $region79: #{tpu_custom_call.1} parent=5 // pred_region
        %s439 = ssub.s32 %s22, 1
        %s440 = smul.u32 8, %s27
        %p441 = scmp.lt.s32.totalorder %s440, 31
        %s442 = scalar_select %p441, %s440, 31
        %s443 = smul.addr %s442, 8
        %s444 = scalar_lea.vmem %s0, %s443
        %p445 = pneg %p48
        %p446 = pneg %p45
        %p447 = pneg %p69
        %p448 = pneg %p66
        %p449 = pneg %p90
        %p450 = pneg %p87
        %p451 = pneg %p111
        %p452 = pneg %p108
        %p453 = pneg %p132
        %p454 = pneg %p129
        %p455 = pneg %p153
        %p456 = pneg %p150
        %p457 = pneg %p174
        %p458 = pneg %p171
        %p459 = pneg %p195
        %p460 = pneg %p192
        %p461 = pneg %p216
        %p462 = pneg %p213
        %p463 = pneg %p237
        %p464 = pneg %p234
        %p465 = pneg %p258
        %p466 = pneg %p255
        %p467 = pneg %p279
        %p468 = pneg %p276
        %p469 = pneg %p300
        %p470 = pneg %p297
        %p471 = pneg %p321
        %p472 = pneg %p318
        %p473 = pneg %p342
        %p474 = pneg %p339
        %p475 = pneg %p363
        %p476 = pneg %p360
        %s477 = smul.u32 8, %s27
        %p478 = scmp.lt.s32.totalorder %s477, 31
        %s479 = scalar_select %p478, %s477, 31
        %s480 = smul.addr %s479, 8
        %s481 = scalar_lea.vmem %s0, %s480
        %s482 = smul.u32 8, %s27
        %v483 = vld [vmem:[%s481] sm:$0xff]
        %v484 = vld [vmem:[%s481 + $0x8] sm:$0xff]
        %v485 = vld [vmem:[%s481 + $0x10] sm:$0xff]
        %v486 = vld [vmem:[%s481 + $0x18] sm:$0xff]
        %v487 = vld [vmem:[%s481 + $0x20] sm:$0xff]
        %v488 = vld [vmem:[%s481 + $0x28] sm:$0xff]
        %v489 = vld [vmem:[%s481 + $0x30] sm:$0xff]
        %v490 = vld [vmem:[%s481 + $0x38] sm:$0xff]
        %v491 = vld [vmem:[%s1] sm:$0x1f]
        %v492 = vld [vmem:[%s2] sm:$0x1]
        %v494 = vlaneseq
        %v495 = vshrl.u32 %v494, 7
        %v496 = vsub.s32 0, %v495
        %v497 = vrot.slane %v492, %v496
        %vm499 = vcmask 39936
        %v501 = vsel %vm499, %v483, 0
        %v504 = vsel %vm499, %v484, 0
        %v507 = vsel %vm499, %v485, 0
        %v510 = vsel %vm499, %v486, 0
        %v513 = vsel %vm499, %v487, 0
        %v516 = vsel %vm499, %v488, 0
        %v519 = vsel %vm499, %v489, 0
        %v522 = vsel %vm499, %v490, 0
        %vm524 = vcmask 1044480
        %v526 = vsel %vm524, %v491, 0
        %528 = vmatprep.subr.mxu0 0.0
        %529 = vmatpush1.msra.mxu0 %v526
        %530 = vmatprep.subr.mxu0 0.0
        %531 = vmatpush1.msra.mxu0 0.0
        %532 = vmatprep.subr.mxu0 0.0
        %533 = vmatpush1.msra.mxu0 0.0
        %534 = vmatprep.subr.mxu0 0.0
        %535 = vmatpush1.msra.mxu0 0.0
        %536 = vmatprep.subr.mxu0 0.0
        %537 = vmatpush1.msra.mxu0 0.0
        %538 = vmatprep.subr.mxu0 0.0
        %539 = vmatpush1.msra.mxu0 0.0
        %540 = vmatprep.subr.mxu0 0.0
        %541 = vmatpush1.msra.mxu0 0.0
        %542 = vmatprep.subr.mxu0 0.0
        %543 = vmatpush1.msra.mxu0 0.0
        %544 = vmatprep.subr.mxu0 0.0
        %545 = vmatpush1.msra.mxu0 0.0
        %546 = vmatprep.subr.mxu0 0.0
        %547 = vmatpush1.msra.mxu0 0.0
        %548 = vmatprep.subr.mxu0 0.0
        %549 = vmatpush1.msra.mxu0 0.0
        %550 = vmatprep.subr.mxu0 0.0
        %551 = vmatpush1.msra.mxu0 0.0
        %552 = vmatprep.subr.mxu0 0.0
        %553 = vmatpush1.msra.mxu0 0.0
        %554 = vmatprep.subr.mxu0 0.0
        %555 = vmatpush1.msra.mxu0 0.0
        %556 = vmatprep.subr.mxu0 0.0
        %557 = vmatpush1.msra.mxu0 0.0
        %558 = vmatprep.subr.mxu0 0.0
        %559 = vmatpush1.msra.mxu0 0.0
        %560 = vmatprep.subr.mxu0 0.0
        %561 = vmatpush1.msra.mxu0 0.0
        %562 = vmatprep.subr.mxu0 0.0
        %563 = vmatpush1.msra.mxu0 0.0
        %564 = vmatprep.subr.mxu0 0.0
        %565 = vmatpush1.msra.mxu0 0.0
        %566 = vmatprep.subr.mxu0 0.0
        %567 = vmatpush1.msra.mxu0 0.0
        %568 = vmatprep.subr.mxu0 0.0
        %569 = vmatpush1.msra.mxu0 0.0
        %570 = vmatprep.subr.mxu0 0.0
        %571 = vmatpush1.msra.mxu0 0.0
        %572 = vmatprep.subr.mxu0 0.0
        %573 = vmatpush1.msra.mxu0 0.0
        %574 = vmatprep.subr.mxu0 0.0
        %575 = vmatpush1.msra.mxu0 0.0
        %576 = vmatprep.subr.mxu0 0.0
        %577 = vmatpush1.msra.mxu0 0.0
        %578 = vmatprep.subr.mxu0 0.0
        %579 = vmatpush1.msra.mxu0 0.0
        %580 = vmatprep.subr.mxu0 0.0
        %581 = vmatpush1.msra.mxu0 0.0
        %582 = vmatprep.subr.mxu0 0.0
        %583 = vmatpush1.msra.mxu0 0.0
        %584 = vmatprep.subr.mxu0 0.0
        %585 = vmatpush1.msra.mxu0 0.0
        %586 = vmatprep.subr.mxu0 0.0
        %587 = vmatpush1.msra.mxu0 0.0
        %588 = vmatprep.subr.mxu0 0.0
        %589 = vmatpush1.msra.mxu0 0.0
        %590 = vmatprep.subr.mxu0 0.0
        %591 = vmatpush1.msra.mxu0 0.0
        %592 = vmatprep.mubr.f32.mxu0 0.0
        %593 = vmatmul.mubr.f32.gmra.mrb[0].mxu0 %v501
        %v594 = vpop.f32.mrb[0].mxu0
        %v595 = vadd.f32 %v497, %v594
        %v596 = vpop.f32.mrb[0].mxu0
        %597 = vmatprep.mubr.f32.mxu0 0.0
        %598 = vmatmul.mubr.f32.gmra.mrb[0].mxu0 %v504
        %v599 = vpop.f32.mrb[0].mxu0
        %v600 = vadd.f32 %v497, %v599
        %v601 = vpop.f32.mrb[0].mxu0
        %602 = vmatprep.mubr.f32.mxu0 0.0
        %603 = vmatmul.mubr.f32.gmra.mrb[0].mxu0 %v507
        %v604 = vpop.f32.mrb[0].mxu0
        %v605 = vadd.f32 %v497, %v604
        %v606 = vpop.f32.mrb[0].mxu0
        %607 = vmatprep.mubr.f32.mxu0 0.0
        %608 = vmatmul.mubr.f32.gmra.mrb[0].mxu0 %v510
        %v609 = vpop.f32.mrb[0].mxu0
        %v610 = vadd.f32 %v497, %v609
        %v611 = vpop.f32.mrb[0].mxu0
        %612 = vmatprep.mubr.f32.mxu0 0.0
        %613 = vmatmul.mubr.f32.gmra.mrb[0].mxu0 %v513
        %v614 = vpop.f32.mrb[0].mxu0
        %v615 = vadd.f32 %v497, %v614
        %v616 = vpop.f32.mrb[0].mxu0
        %617 = vmatprep.mubr.f32.mxu0 0.0
        %618 = vmatmul.mubr.f32.gmra.mrb[0].mxu0 %v516
        %v619 = vpop.f32.mrb[0].mxu0
        %v620 = vadd.f32 %v497, %v619
        %v621 = vpop.f32.mrb[0].mxu0
        %622 = vmatprep.mubr.f32.mxu0 0.0
        %623 = vmatmul.mubr.f32.gmra.mrb[0].mxu0 %v519
        %v624 = vpop.f32.mrb[0].mxu0
        %v625 = vadd.f32 %v497, %v624
        %v626 = vpop.f32.mrb[0].mxu0
        %627 = vmatprep.mubr.f32.mxu0 0.0
        %628 = vmatmul.mubr.f32.gmra.mrb[0].mxu0 %v522
        %v629 = vpop.f32.mrb[0].mxu0
        %v630 = vadd.f32 %v497, %v629
        %v631 = vpop.f32.mrb[0].mxu0
        %632 = vdwg.mxu0
        %v633 = vmax.f32 %v595, 0.0
        %v634 = vmax.f32 %v600, 0.0
        %v635 = vmax.f32 %v605, 0.0
        %v636 = vmax.f32 %v610, 0.0
        %v637 = vmax.f32 %v615, 0.0
        %v638 = vmax.f32 %v620, 0.0
        %v639 = vmax.f32 %v625, 0.0
        %v640 = vmax.f32 %v630, 0.0
        %v641 = vld [vmem:[%s3] sm:$0xff]
        %v642 = vld [vmem:[%s3 + $0x8] sm:$0xff]
        %v643 = vld [vmem:[%s4] sm:$0x1]
        %v645 = vlaneseq
        %v646 = vshrl.u32 %v645, 7
        %v647 = vsub.s32 0, %v646
        %v648 = vrot.slane %v643, %v647
        %vm650 = vcmask 130048
        %v652 = vsel %vm650, %v633, 0
        %v655 = vsel %vm650, %v634, 0
        %v658 = vsel %vm650, %v635, 0
        %v661 = vsel %vm650, %v636, 0
        %v664 = vsel %vm650, %v637, 0
        %v667 = vsel %vm650, %v638, 0
        %v670 = vsel %vm650, %v639, 0
        %v673 = vsel %vm650, %v640, 0
        %675 = vmatprep.subr.mxu0 0.0
        %676 = vmatpush1.msra.mxu0 %v641
        %677 = vmatprep.subr.mxu0 0.0
        %678 = vmatpush1.msra.mxu0 %v642
        %679 = vmatprep.subr.mxu0 0.0
        %680 = vmatpush1.msra.mxu0 0.0
        %681 = vmatprep.subr.mxu0 0.0
        %682 = vmatpush1.msra.mxu0 0.0
        %683 = vmatprep.subr.mxu0 0.0
        %684 = vmatpush1.msra.mxu0 0.0
        %685 = vmatprep.subr.mxu0 0.0
        %686 = vmatpush1.msra.mxu0 0.0
        %687 = vmatprep.subr.mxu0 0.0
        %688 = vmatpush1.msra.mxu0 0.0
        %689 = vmatprep.subr.mxu0 0.0
        %690 = vmatpush1.msra.mxu0 0.0
        %691 = vmatprep.subr.mxu0 0.0
        %692 = vmatpush1.msra.mxu0 0.0
        %693 = vmatprep.subr.mxu0 0.0
        %694 = vmatpush1.msra.mxu0 0.0
        %695 = vmatprep.subr.mxu0 0.0
        %696 = vmatpush1.msra.mxu0 0.0
        %697 = vmatprep.subr.mxu0 0.0
        %698 = vmatpush1.msra.mxu0 0.0
        %699 = vmatprep.subr.mxu0 0.0
        %700 = vmatpush1.msra.mxu0 0.0
        %701 = vmatprep.subr.mxu0 0.0
        %702 = vmatpush1.msra.mxu0 0.0
        %703 = vmatprep.subr.mxu0 0.0
        %704 = vmatpush1.msra.mxu0 0.0
        %705 = vmatprep.subr.mxu0 0.0
        %706 = vmatpush1.msra.mxu0 0.0
        %707 = vmatprep.subr.mxu0 0.0
        %708 = vmatpush1.msra.mxu0 0.0
        %709 = vmatprep.subr.mxu0 0.0
        %710 = vmatpush1.msra.mxu0 0.0
        %711 = vmatprep.subr.mxu0 0.0
        %712 = vmatpush1.msra.mxu0 0.0
        %713 = vmatprep.subr.mxu0 0.0
        %714 = vmatpush1.msra.mxu0 0.0
        %715 = vmatprep.subr.mxu0 0.0
        %716 = vmatpush1.msra.mxu0 0.0
        %717 = vmatprep.subr.mxu0 0.0
        %718 = vmatpush1.msra.mxu0 0.0
        %719 = vmatprep.subr.mxu0 0.0
        %720 = vmatpush1.msra.mxu0 0.0
        %721 = vmatprep.subr.mxu0 0.0
        %722 = vmatpush1.msra.mxu0 0.0
        %723 = vmatprep.subr.mxu0 0.0
        %724 = vmatpush1.msra.mxu0 0.0
        %725 = vmatprep.subr.mxu0 0.0
        %726 = vmatpush1.msra.mxu0 0.0
        %727 = vmatprep.subr.mxu0 0.0
        %728 = vmatpush1.msra.mxu0 0.0
        %729 = vmatprep.subr.mxu0 0.0
        %730 = vmatpush1.msra.mxu0 0.0
        %731 = vmatprep.subr.mxu0 0.0
        %732 = vmatpush1.msra.mxu0 0.0
        %733 = vmatprep.subr.mxu0 0.0
        %734 = vmatpush1.msra.mxu0 0.0
        %735 = vmatprep.subr.mxu0 0.0
        %736 = vmatpush1.msra.mxu0 0.0
        %737 = vmatprep.subr.mxu0 0.0
        %738 = vmatpush1.msra.mxu0 0.0
        %739 = vmatprep.mubr.f32.mxu0 0.0
        %740 = vmatmul.mubr.f32.gmra.mrb[0].mxu0 %v652
        %v741 = vpop.f32.mrb[0].mxu0
        %v742 = vadd.f32 %v648, %v741
        %v743 = vpop.f32.mrb[0].mxu0
        %744 = vmatprep.mubr.f32.mxu0 0.0
        %745 = vmatmul.mubr.f32.gmra.mrb[0].mxu0 %v655
        %v746 = vpop.f32.mrb[0].mxu0
        %v747 = vadd.f32 %v648, %v746
        %v748 = vpop.f32.mrb[0].mxu0
        %749 = vmatprep.mubr.f32.mxu0 0.0
        %750 = vmatmul.mubr.f32.gmra.mrb[0].mxu0 %v658
        %v751 = vpop.f32.mrb[0].mxu0
        %v752 = vadd.f32 %v648, %v751
        %v753 = vpop.f32.mrb[0].mxu0
        %754 = vmatprep.mubr.f32.mxu0 0.0
        %755 = vmatmul.mubr.f32.gmra.mrb[0].mxu0 %v661
        %v756 = vpop.f32.mrb[0].mxu0
        %v757 = vadd.f32 %v648, %v756
        %v758 = vpop.f32.mrb[0].mxu0
        %759 = vmatprep.mubr.f32.mxu0 0.0
        %760 = vmatmul.mubr.f32.gmra.mrb[0].mxu0 %v664
        %v761 = vpop.f32.mrb[0].mxu0
        %v762 = vadd.f32 %v648, %v761
        %v763 = vpop.f32.mrb[0].mxu0
        %764 = vmatprep.mubr.f32.mxu0 0.0
        %765 = vmatmul.mubr.f32.gmra.mrb[0].mxu0 %v667
        %v766 = vpop.f32.mrb[0].mxu0
        %v767 = vadd.f32 %v648, %v766
        %v768 = vpop.f32.mrb[0].mxu0
        %769 = vmatprep.mubr.f32.mxu0 0.0
        %770 = vmatmul.mubr.f32.gmra.mrb[0].mxu0 %v670
        %v771 = vpop.f32.mrb[0].mxu0
        %v772 = vadd.f32 %v648, %v771
        %v773 = vpop.f32.mrb[0].mxu0
        %774 = vmatprep.mubr.f32.mxu0 0.0
        %775 = vmatmul.mubr.f32.gmra.mrb[0].mxu0 %v673
        %v776 = vpop.f32.mrb[0].mxu0
        %v777 = vadd.f32 %v648, %v776
        %v778 = vpop.f32.mrb[0].mxu0
        %779 = vdwg.mxu0
        %v780 = vld [vmem:[%s5] sm:$0xff]
        %v781 = vld [vmem:[%s6] sm:$0x1]
        %v783 = vlaneseq
        %v784 = vshrl.u32 %v783, 7
        %v785 = vsub.s32 0, %v784
        %v786 = vrot.slane %v781, %v785
        %vm788 = vcmask 64512
        %v790 = vsel %vm788, %v742, 0
        %v793 = vsel %vm788, %v747, 0
        %v796 = vsel %vm788, %v752, 0
        %v799 = vsel %vm788, %v757, 0
        %v802 = vsel %vm788, %v762, 0
        %v805 = vsel %vm788, %v767, 0
        %v808 = vsel %vm788, %v772, 0
        %v811 = vsel %vm788, %v777, 0
        %813 = vmatprep.subr.mxu0 0.0
        %814 = vmatpush1.msra.mxu0 %v780
        %815 = vmatprep.subr.mxu0 0.0
        %816 = vmatpush1.msra.mxu0 0.0
        %817 = vmatprep.subr.mxu0 0.0
        %818 = vmatpush1.msra.mxu0 0.0
        %819 = vmatprep.subr.mxu0 0.0
        %820 = vmatpush1.msra.mxu0 0.0
        %821 = vmatprep.subr.mxu0 0.0
        %822 = vmatpush1.msra.mxu0 0.0
        %823 = vmatprep.subr.mxu0 0.0
        %824 = vmatpush1.msra.mxu0 0.0
        %825 = vmatprep.subr.mxu0 0.0
        %826 = vmatpush1.msra.mxu0 0.0
        %827 = vmatprep.subr.mxu0 0.0
        %828 = vmatpush1.msra.mxu0 0.0
        %829 = vmatprep.subr.mxu0 0.0
        %830 = vmatpush1.msra.mxu0 0.0
        %831 = vmatprep.subr.mxu0 0.0
        %832 = vmatpush1.msra.mxu0 0.0
        %833 = vmatprep.subr.mxu0 0.0
        %834 = vmatpush1.msra.mxu0 0.0
        %835 = vmatprep.subr.mxu0 0.0
        %836 = vmatpush1.msra.mxu0 0.0
        %837 = vmatprep.subr.mxu0 0.0
        %838 = vmatpush1.msra.mxu0 0.0
        %839 = vmatprep.subr.mxu0 0.0
        %840 = vmatpush1.msra.mxu0 0.0
        %841 = vmatprep.subr.mxu0 0.0
        %842 = vmatpush1.msra.mxu0 0.0
        %843 = vmatprep.subr.mxu0 0.0
        %844 = vmatpush1.msra.mxu0 0.0
        %845 = vmatprep.subr.mxu0 0.0
        %846 = vmatpush1.msra.mxu0 0.0
        %847 = vmatprep.subr.mxu0 0.0
        %848 = vmatpush1.msra.mxu0 0.0
        %849 = vmatprep.subr.mxu0 0.0
        %850 = vmatpush1.msra.mxu0 0.0
        %851 = vmatprep.subr.mxu0 0.0
        %852 = vmatpush1.msra.mxu0 0.0
        %853 = vmatprep.subr.mxu0 0.0
        %854 = vmatpush1.msra.mxu0 0.0
        %855 = vmatprep.subr.mxu0 0.0
        %856 = vmatpush1.msra.mxu0 0.0
        %857 = vmatprep.subr.mxu0 0.0
        %858 = vmatpush1.msra.mxu0 0.0
        %859 = vmatprep.subr.mxu0 0.0
        %860 = vmatpush1.msra.mxu0 0.0
        %861 = vmatprep.subr.mxu0 0.0
        %862 = vmatpush1.msra.mxu0 0.0
        %863 = vmatprep.subr.mxu0 0.0
        %864 = vmatpush1.msra.mxu0 0.0
        %865 = vmatprep.subr.mxu0 0.0
        %866 = vmatpush1.msra.mxu0 0.0
        %867 = vmatprep.subr.mxu0 0.0
        %868 = vmatpush1.msra.mxu0 0.0
        %869 = vmatprep.subr.mxu0 0.0
        %870 = vmatpush1.msra.mxu0 0.0
        %871 = vmatprep.subr.mxu0 0.0
        %872 = vmatpush1.msra.mxu0 0.0
        %873 = vmatprep.subr.mxu0 0.0
        %874 = vmatpush1.msra.mxu0 0.0
        %875 = vmatprep.subr.mxu0 0.0
        %876 = vmatpush1.msra.mxu0 0.0
        %877 = vmatprep.mubr.f32.mxu0 0.0
        %878 = vmatmul.mubr.f32.gmra.mrb[0].mxu0 %v790
        %v879 = vpop.f32.mrb[0].mxu0
        %v880 = vadd.f32 %v786, %v879
        %v881 = vpop.f32.mrb[0].mxu0
        %882 = vmatprep.mubr.f32.mxu0 0.0
        %883 = vmatmul.mubr.f32.gmra.mrb[0].mxu0 %v793
        %v884 = vpop.f32.mrb[0].mxu0
        %v885 = vadd.f32 %v786, %v884
        %v886 = vpop.f32.mrb[0].mxu0
        %887 = vmatprep.mubr.f32.mxu0 0.0
        %888 = vmatmul.mubr.f32.gmra.mrb[0].mxu0 %v796
        %v889 = vpop.f32.mrb[0].mxu0
        %v890 = vadd.f32 %v786, %v889
        %v891 = vpop.f32.mrb[0].mxu0
        %892 = vmatprep.mubr.f32.mxu0 0.0
        %893 = vmatmul.mubr.f32.gmra.mrb[0].mxu0 %v799
        %v894 = vpop.f32.mrb[0].mxu0
        %v895 = vadd.f32 %v786, %v894
        %v896 = vpop.f32.mrb[0].mxu0
        %897 = vmatprep.mubr.f32.mxu0 0.0
        %898 = vmatmul.mubr.f32.gmra.mrb[0].mxu0 %v802
        %v899 = vpop.f32.mrb[0].mxu0
        %v900 = vadd.f32 %v786, %v899
        %v901 = vpop.f32.mrb[0].mxu0
        %902 = vmatprep.mubr.f32.mxu0 0.0
        %903 = vmatmul.mubr.f32.gmra.mrb[0].mxu0 %v805
        %v904 = vpop.f32.mrb[0].mxu0
        %v905 = vadd.f32 %v786, %v904
        %v906 = vpop.f32.mrb[0].mxu0
        %907 = vmatprep.mubr.f32.mxu0 0.0
        %908 = vmatmul.mubr.f32.gmra.mrb[0].mxu0 %v808
        %v909 = vpop.f32.mrb[0].mxu0
        %v910 = vadd.f32 %v786, %v909
        %v911 = vpop.f32.mrb[0].mxu0
        %912 = vmatprep.mubr.f32.mxu0 0.0
        %913 = vmatmul.mubr.f32.gmra.mrb[0].mxu0 %v811
        %v914 = vpop.f32.mrb[0].mxu0
        %v915 = vadd.f32 %v786, %v914
        %v916 = vpop.f32.mrb[0].mxu0
        %917 = vdwg.mxu0
        %v918 = vmax.f32 %v880, 0.0
        %v919 = vmax.f32 %v885, 0.0
        %v920 = vmax.f32 %v890, 0.0
        %v921 = vmax.f32 %v895, 0.0
        %v922 = vmax.f32 %v900, 0.0
        %v923 = vmax.f32 %v905, 0.0
        %v924 = vmax.f32 %v910, 0.0
        %v925 = vmax.f32 %v915, 0.0
        %v926 = vld [vmem:[%s7] sm:$0xf]
        %v927 = vld [vmem:[%s8] sm:$0x1]
        %v929 = vlaneseq
        %v930 = vshrl.u32 %v929, 7
        %v931 = vsub.s32 0, %v930
        %v932 = vrot.slane %v927, %v931
        %vm934 = vcmask 31744
        %v936 = vsel %vm934, %v918, 0
        %v939 = vsel %vm934, %v919, 0
        %v942 = vsel %vm934, %v920, 0
        %v945 = vsel %vm934, %v921, 0
        %v948 = vsel %vm934, %v922, 0
        %v951 = vsel %vm934, %v923, 0
        %v954 = vsel %vm934, %v924, 0
        %v957 = vsel %vm934, %v925, 0
        %vm959 = vcmask 1043456
        %v961 = vsel %vm959, %v926, 0
        %963 = vmatprep.subr.mxu0 0.0
        %964 = vmatpush1.msra.mxu0 %v961
        %965 = vmatprep.subr.mxu0 0.0
        %966 = vmatpush1.msra.mxu0 0.0
        %967 = vmatprep.subr.mxu0 0.0
        %968 = vmatpush1.msra.mxu0 0.0
        %969 = vmatprep.subr.mxu0 0.0
        %970 = vmatpush1.msra.mxu0 0.0
        %971 = vmatprep.subr.mxu0 0.0
        %972 = vmatpush1.msra.mxu0 0.0
        %973 = vmatprep.subr.mxu0 0.0
        %974 = vmatpush1.msra.mxu0 0.0
        %975 = vmatprep.subr.mxu0 0.0
        %976 = vmatpush1.msra.mxu0 0.0
        %977 = vmatprep.subr.mxu0 0.0
        %978 = vmatpush1.msra.mxu0 0.0
        %979 = vmatprep.subr.mxu0 0.0
        %980 = vmatpush1.msra.mxu0 0.0
        %981 = vmatprep.subr.mxu0 0.0
        %982 = vmatpush1.msra.mxu0 0.0
        %983 = vmatprep.subr.mxu0 0.0
        %984 = vmatpush1.msra.mxu0 0.0
        %985 = vmatprep.subr.mxu0 0.0
        %986 = vmatpush1.msra.mxu0 0.0
        %987 = vmatprep.subr.mxu0 0.0
        %988 = vmatpush1.msra.mxu0 0.0
        %989 = vmatprep.subr.mxu0 0.0
        %990 = vmatpush1.msra.mxu0 0.0
        %991 = vmatprep.subr.mxu0 0.0
        %992 = vmatpush1.msra.mxu0 0.0
        %993 = vmatprep.subr.mxu0 0.0
        %994 = vmatpush1.msra.mxu0 0.0
        %995 = vmatprep.subr.mxu0 0.0
        %996 = vmatpush1.msra.mxu0 0.0
        %997 = vmatprep.subr.mxu0 0.0
        %998 = vmatpush1.msra.mxu0 0.0
        %999 = vmatprep.subr.mxu0 0.0
        %1000 = vmatpush1.msra.mxu0 0.0
        %1001 = vmatprep.subr.mxu0 0.0
        %1002 = vmatpush1.msra.mxu0 0.0
        %1003 = vmatprep.subr.mxu0 0.0
        %1004 = vmatpush1.msra.mxu0 0.0
        %1005 = vmatprep.subr.mxu0 0.0
        %1006 = vmatpush1.msra.mxu0 0.0
        %1007 = vmatprep.subr.mxu0 0.0
        %1008 = vmatpush1.msra.mxu0 0.0
        %1009 = vmatprep.subr.mxu0 0.0
        %1010 = vmatpush1.msra.mxu0 0.0
        %1011 = vmatprep.subr.mxu0 0.0
        %1012 = vmatpush1.msra.mxu0 0.0
        %1013 = vmatprep.subr.mxu0 0.0
        %1014 = vmatpush1.msra.mxu0 0.0
        %1015 = vmatprep.subr.mxu0 0.0
        %1016 = vmatpush1.msra.mxu0 0.0
        %1017 = vmatprep.subr.mxu0 0.0
        %1018 = vmatpush1.msra.mxu0 0.0
        %1019 = vmatprep.subr.mxu0 0.0
        %1020 = vmatpush1.msra.mxu0 0.0
        %1021 = vmatprep.subr.mxu0 0.0
        %1022 = vmatpush1.msra.mxu0 0.0
        %1023 = vmatprep.subr.mxu0 0.0
        %1024 = vmatpush1.msra.mxu0 0.0
        %1025 = vmatprep.subr.mxu0 0.0
        %1026 = vmatpush1.msra.mxu0 0.0
        %1027 = vmatprep.mubr.f32.mxu0 0.0
        %1028 = vmatmul.mubr.f32.gmra.mrb[0].mxu0 %v936
        %v1029 = vpop.f32.mrb[0].mxu0
        %v1030 = vadd.f32 %v932, %v1029
        %v1031 = vpop.f32.mrb[0].mxu0
        %1032 = vmatprep.mubr.f32.mxu0 0.0
        %1033 = vmatmul.mubr.f32.gmra.mrb[0].mxu0 %v939
        %v1034 = vpop.f32.mrb[0].mxu0
        %v1035 = vadd.f32 %v932, %v1034
        %v1036 = vpop.f32.mrb[0].mxu0
        %1037 = vmatprep.mubr.f32.mxu0 0.0
        %1038 = vmatmul.mubr.f32.gmra.mrb[0].mxu0 %v942
        %v1039 = vpop.f32.mrb[0].mxu0
        %v1040 = vadd.f32 %v932, %v1039
        %v1041 = vpop.f32.mrb[0].mxu0
        %1042 = vmatprep.mubr.f32.mxu0 0.0
        %1043 = vmatmul.mubr.f32.gmra.mrb[0].mxu0 %v945
        %v1044 = vpop.f32.mrb[0].mxu0
        %v1045 = vadd.f32 %v932, %v1044
        %v1046 = vpop.f32.mrb[0].mxu0
        %1047 = vmatprep.mubr.f32.mxu0 0.0
        %1048 = vmatmul.mubr.f32.gmra.mrb[0].mxu0 %v948
        %v1049 = vpop.f32.mrb[0].mxu0
        %v1050 = vadd.f32 %v932, %v1049
        %v1051 = vpop.f32.mrb[0].mxu0
        %1052 = vmatprep.mubr.f32.mxu0 0.0
        %1053 = vmatmul.mubr.f32.gmra.mrb[0].mxu0 %v951
        %v1054 = vpop.f32.mrb[0].mxu0
        %v1055 = vadd.f32 %v932, %v1054
        %v1056 = vpop.f32.mrb[0].mxu0
        %1057 = vmatprep.mubr.f32.mxu0 0.0
        %1058 = vmatmul.mubr.f32.gmra.mrb[0].mxu0 %v954
        %v1059 = vpop.f32.mrb[0].mxu0
        %v1060 = vadd.f32 %v932, %v1059
        %v1061 = vpop.f32.mrb[0].mxu0
        %1062 = vmatprep.mubr.f32.mxu0 0.0
        %1063 = vmatmul.mubr.f32.gmra.mrb[0].mxu0 %v957
        %v1064 = vpop.f32.mrb[0].mxu0
        %v1065 = vadd.f32 %v932, %v1064
        %v1066 = vpop.f32.mrb[0].mxu0
        %1067 = vdwg.mxu0
        %v1068 = vld [vmem:[%s9] sm:$0xff]
        %v1069 = vld [vmem:[%s10] sm:$0x1]
        %v1071 = vlaneseq
        %v1072 = vshrl.u32 %v1071, 7
        %v1073 = vsub.s32 0, %v1072
        %v1074 = vrot.slane %v1069, %v1073
        %v1077 = vsel %vm788, %v1030, 0
        %v1080 = vsel %vm788, %v1035, 0
        %v1083 = vsel %vm788, %v1040, 0
        %v1086 = vsel %vm788, %v1045, 0
        %v1089 = vsel %vm788, %v1050, 0
        %v1092 = vsel %vm788, %v1055, 0
        %v1095 = vsel %vm788, %v1060, 0
        %v1098 = vsel %vm788, %v1065, 0
        %1100 = vmatprep.subr.mxu0 0.0
        %1101 = vmatpush1.msra.mxu0 %v1068
        %1102 = vmatprep.subr.mxu0 0.0
        %1103 = vmatpush1.msra.mxu0 0.0
        %1104 = vmatprep.subr.mxu0 0.0
        %1105 = vmatpush1.msra.mxu0 0.0
        %1106 = vmatprep.subr.mxu0 0.0
        %1107 = vmatpush1.msra.mxu0 0.0
        %1108 = vmatprep.subr.mxu0 0.0
        %1109 = vmatpush1.msra.mxu0 0.0
        %1110 = vmatprep.subr.mxu0 0.0
        %1111 = vmatpush1.msra.mxu0 0.0
        %1112 = vmatprep.subr.mxu0 0.0
        %1113 = vmatpush1.msra.mxu0 0.0
        %1114 = vmatprep.subr.mxu0 0.0
        %1115 = vmatpush1.msra.mxu0 0.0
        %1116 = vmatprep.subr.mxu0 0.0
        %1117 = vmatpush1.msra.mxu0 0.0
        %1118 = vmatprep.subr.mxu0 0.0
        %1119 = vmatpush1.msra.mxu0 0.0
        %1120 = vmatprep.subr.mxu0 0.0
        %1121 = vmatpush1.msra.mxu0 0.0
        %1122 = vmatprep.subr.mxu0 0.0
        %1123 = vmatpush1.msra.mxu0 0.0
        %1124 = vmatprep.subr.mxu0 0.0
        %1125 = vmatpush1.msra.mxu0 0.0
        %1126 = vmatprep.subr.mxu0 0.0
        %1127 = vmatpush1.msra.mxu0 0.0
        %1128 = vmatprep.subr.mxu0 0.0
        %1129 = vmatpush1.msra.mxu0 0.0
        %1130 = vmatprep.subr.mxu0 0.0
        %1131 = vmatpush1.msra.mxu0 0.0
        %1132 = vmatprep.subr.mxu0 0.0
        %1133 = vmatpush1.msra.mxu0 0.0
        %1134 = vmatprep.subr.mxu0 0.0
        %1135 = vmatpush1.msra.mxu0 0.0
        %1136 = vmatprep.subr.mxu0 0.0
        %1137 = vmatpush1.msra.mxu0 0.0
        %1138 = vmatprep.subr.mxu0 0.0
        %1139 = vmatpush1.msra.mxu0 0.0
        %1140 = vmatprep.subr.mxu0 0.0
        %1141 = vmatpush1.msra.mxu0 0.0
        %1142 = vmatprep.subr.mxu0 0.0
        %1143 = vmatpush1.msra.mxu0 0.0
        %1144 = vmatprep.subr.mxu0 0.0
        %1145 = vmatpush1.msra.mxu0 0.0
        %1146 = vmatprep.subr.mxu0 0.0
        %1147 = vmatpush1.msra.mxu0 0.0
        %1148 = vmatprep.subr.mxu0 0.0
        %1149 = vmatpush1.msra.mxu0 0.0
        %1150 = vmatprep.subr.mxu0 0.0
        %1151 = vmatpush1.msra.mxu0 0.0
        %1152 = vmatprep.subr.mxu0 0.0
        %1153 = vmatpush1.msra.mxu0 0.0
        %1154 = vmatprep.subr.mxu0 0.0
        %1155 = vmatpush1.msra.mxu0 0.0
        %1156 = vmatprep.subr.mxu0 0.0
        %1157 = vmatpush1.msra.mxu0 0.0
        %1158 = vmatprep.subr.mxu0 0.0
        %1159 = vmatpush1.msra.mxu0 0.0
        %1160 = vmatprep.subr.mxu0 0.0
        %1161 = vmatpush1.msra.mxu0 0.0
        %1162 = vmatprep.subr.mxu0 0.0
        %1163 = vmatpush1.msra.mxu0 0.0
        %1164 = vmatprep.mubr.f32.mxu0 0.0
        %1165 = vmatmul.mubr.f32.gmra.mrb[0].mxu0 %v1077
        %v1166 = vpop.f32.mrb[0].mxu0
        %v1167 = vadd.f32 %v1074, %v1166
        %v1168 = vpop.f32.mrb[0].mxu0
        %1169 = vmatprep.mubr.f32.mxu0 0.0
        %1170 = vmatmul.mubr.f32.gmra.mrb[0].mxu0 %v1080
        %v1171 = vpop.f32.mrb[0].mxu0
        %v1172 = vadd.f32 %v1074, %v1171
        %v1173 = vpop.f32.mrb[0].mxu0
        %1174 = vmatprep.mubr.f32.mxu0 0.0
        %1175 = vmatmul.mubr.f32.gmra.mrb[0].mxu0 %v1083
        %v1176 = vpop.f32.mrb[0].mxu0
        %v1177 = vadd.f32 %v1074, %v1176
        %v1178 = vpop.f32.mrb[0].mxu0
        %1179 = vmatprep.mubr.f32.mxu0 0.0
        %1180 = vmatmul.mubr.f32.gmra.mrb[0].mxu0 %v1086
        %v1181 = vpop.f32.mrb[0].mxu0
        %v1182 = vadd.f32 %v1074, %v1181
        %v1183 = vpop.f32.mrb[0].mxu0
        %1184 = vmatprep.mubr.f32.mxu0 0.0
        %1185 = vmatmul.mubr.f32.gmra.mrb[0].mxu0 %v1089
        %v1186 = vpop.f32.mrb[0].mxu0
        %v1187 = vadd.f32 %v1074, %v1186
        %v1188 = vpop.f32.mrb[0].mxu0
        %1189 = vmatprep.mubr.f32.mxu0 0.0
        %1190 = vmatmul.mubr.f32.gmra.mrb[0].mxu0 %v1092
        %v1191 = vpop.f32.mrb[0].mxu0
        %v1192 = vadd.f32 %v1074, %v1191
        %v1193 = vpop.f32.mrb[0].mxu0
        %1194 = vmatprep.mubr.f32.mxu0 0.0
        %1195 = vmatmul.mubr.f32.gmra.mrb[0].mxu0 %v1095
        %v1196 = vpop.f32.mrb[0].mxu0
        %v1197 = vadd.f32 %v1074, %v1196
        %v1198 = vpop.f32.mrb[0].mxu0
        %1199 = vmatprep.mubr.f32.mxu0 0.0
        %1200 = vmatmul.mubr.f32.gmra.mrb[0].mxu0 %v1098
        %v1201 = vpop.f32.mrb[0].mxu0
        %v1202 = vadd.f32 %v1074, %v1201
        %v1203 = vpop.f32.mrb[0].mxu0
        %1204 = vdwg.mxu0
        %v1205 = vmax.f32 %v1167, 0.0
        %v1206 = vmax.f32 %v1172, 0.0
        %v1207 = vmax.f32 %v1177, 0.0
        %v1208 = vmax.f32 %v1182, 0.0
        %v1209 = vmax.f32 %v1187, 0.0
        %v1210 = vmax.f32 %v1192, 0.0
        %v1211 = vmax.f32 %v1197, 0.0
        %v1212 = vmax.f32 %v1202, 0.0
        %v1213 = vld [vmem:[%s11] sm:$0xff]
        %v1214 = vld [vmem:[%s11 + $0x8] sm:$0xff]
        %v1215 = vld [vmem:[%s12] sm:$0x1]
        %v1217 = vlaneseq
        %v1218 = vshrl.u32 %v1217, 7
        %v1219 = vsub.s32 0, %v1218
        %v1220 = vrot.slane %v1215, %v1219
        %v1223 = vsel %vm650, %v1205, 0
        %v1226 = vsel %vm650, %v1206, 0
        %v1229 = vsel %vm650, %v1207, 0
        %v1232 = vsel %vm650, %v1208, 0
        %v1235 = vsel %vm650, %v1209, 0
        %v1238 = vsel %vm650, %v1210, 0
        %v1241 = vsel %vm650, %v1211, 0
        %v1244 = vsel %vm650, %v1212, 0
        %1246 = vmatprep.subr.mxu0 0.0
        %1247 = vmatpush1.msra.mxu0 %v1213
        %1248 = vmatprep.subr.mxu0 0.0
        %1249 = vmatpush1.msra.mxu0 %v1214
        %1250 = vmatprep.subr.mxu0 0.0
        %1251 = vmatpush1.msra.mxu0 0.0
        %1252 = vmatprep.subr.mxu0 0.0
        %1253 = vmatpush1.msra.mxu0 0.0
        %1254 = vmatprep.subr.mxu0 0.0
        %1255 = vmatpush1.msra.mxu0 0.0
        %1256 = vmatprep.subr.mxu0 0.0
        %1257 = vmatpush1.msra.mxu0 0.0
        %1258 = vmatprep.subr.mxu0 0.0
        %1259 = vmatpush1.msra.mxu0 0.0
        %1260 = vmatprep.subr.mxu0 0.0
        %1261 = vmatpush1.msra.mxu0 0.0
        %1262 = vmatprep.subr.mxu0 0.0
        %1263 = vmatpush1.msra.mxu0 0.0
        %1264 = vmatprep.subr.mxu0 0.0
        %1265 = vmatpush1.msra.mxu0 0.0
        %1266 = vmatprep.subr.mxu0 0.0
        %1267 = vmatpush1.msra.mxu0 0.0
        %1268 = vmatprep.subr.mxu0 0.0
        %1269 = vmatpush1.msra.mxu0 0.0
        %1270 = vmatprep.subr.mxu0 0.0
        %1271 = vmatpush1.msra.mxu0 0.0
        %1272 = vmatprep.subr.mxu0 0.0
        %1273 = vmatpush1.msra.mxu0 0.0
        %1274 = vmatprep.subr.mxu0 0.0
        %1275 = vmatpush1.msra.mxu0 0.0
        %1276 = vmatprep.subr.mxu0 0.0
        %1277 = vmatpush1.msra.mxu0 0.0
        %1278 = vmatprep.subr.mxu0 0.0
        %1279 = vmatpush1.msra.mxu0 0.0
        %1280 = vmatprep.subr.mxu0 0.0
        %1281 = vmatpush1.msra.mxu0 0.0
        %1282 = vmatprep.subr.mxu0 0.0
        %1283 = vmatpush1.msra.mxu0 0.0
        %1284 = vmatprep.subr.mxu0 0.0
        %1285 = vmatpush1.msra.mxu0 0.0
        %1286 = vmatprep.subr.mxu0 0.0
        %1287 = vmatpush1.msra.mxu0 0.0
        %1288 = vmatprep.subr.mxu0 0.0
        %1289 = vmatpush1.msra.mxu0 0.0
        %1290 = vmatprep.subr.mxu0 0.0
        %1291 = vmatpush1.msra.mxu0 0.0
        %1292 = vmatprep.subr.mxu0 0.0
        %1293 = vmatpush1.msra.mxu0 0.0
        %1294 = vmatprep.subr.mxu0 0.0
        %1295 = vmatpush1.msra.mxu0 0.0
        %1296 = vmatprep.subr.mxu0 0.0
        %1297 = vmatpush1.msra.mxu0 0.0
        %1298 = vmatprep.subr.mxu0 0.0
        %1299 = vmatpush1.msra.mxu0 0.0
        %1300 = vmatprep.subr.mxu0 0.0
        %1301 = vmatpush1.msra.mxu0 0.0
        %1302 = vmatprep.subr.mxu0 0.0
        %1303 = vmatpush1.msra.mxu0 0.0
        %1304 = vmatprep.subr.mxu0 0.0
        %1305 = vmatpush1.msra.mxu0 0.0
        %1306 = vmatprep.subr.mxu0 0.0
        %1307 = vmatpush1.msra.mxu0 0.0
        %1308 = vmatprep.subr.mxu0 0.0
        %1309 = vmatpush1.msra.mxu0 0.0
        %1310 = vmatprep.mubr.f32.mxu0 0.0
        %1311 = vmatmul.mubr.f32.gmra.mrb[0].mxu0 %v1223
        %v1312 = vpop.f32.mrb[0].mxu0
        %v1313 = vadd.f32 %v1220, %v1312
        %v1314 = vpop.f32.mrb[0].mxu0
        %1315 = vmatprep.mubr.f32.mxu0 0.0
        %1316 = vmatmul.mubr.f32.gmra.mrb[0].mxu0 %v1226
        %v1317 = vpop.f32.mrb[0].mxu0
        %v1318 = vadd.f32 %v1220, %v1317
        %v1319 = vpop.f32.mrb[0].mxu0
        %1320 = vmatprep.mubr.f32.mxu0 0.0
        %1321 = vmatmul.mubr.f32.gmra.mrb[0].mxu0 %v1229
        %v1322 = vpop.f32.mrb[0].mxu0
        %v1323 = vadd.f32 %v1220, %v1322
        %v1324 = vpop.f32.mrb[0].mxu0
        %1325 = vmatprep.mubr.f32.mxu0 0.0
        %1326 = vmatmul.mubr.f32.gmra.mrb[0].mxu0 %v1232
        %v1327 = vpop.f32.mrb[0].mxu0
        %v1328 = vadd.f32 %v1220, %v1327
        %v1329 = vpop.f32.mrb[0].mxu0
        %1330 = vmatprep.mubr.f32.mxu0 0.0
        %1331 = vmatmul.mubr.f32.gmra.mrb[0].mxu0 %v1235
        %v1332 = vpop.f32.mrb[0].mxu0
        %v1333 = vadd.f32 %v1220, %v1332
        %v1334 = vpop.f32.mrb[0].mxu0
        %1335 = vmatprep.mubr.f32.mxu0 0.0
        %1336 = vmatmul.mubr.f32.gmra.mrb[0].mxu0 %v1238
        %v1337 = vpop.f32.mrb[0].mxu0
        %v1338 = vadd.f32 %v1220, %v1337
        %v1339 = vpop.f32.mrb[0].mxu0
        %1340 = vmatprep.mubr.f32.mxu0 0.0
        %1341 = vmatmul.mubr.f32.gmra.mrb[0].mxu0 %v1241
        %v1342 = vpop.f32.mrb[0].mxu0
        %v1343 = vadd.f32 %v1220, %v1342
        %v1344 = vpop.f32.mrb[0].mxu0
        %1345 = vmatprep.mubr.f32.mxu0 0.0
        %1346 = vmatmul.mubr.f32.gmra.mrb[0].mxu0 %v1244
        %v1347 = vpop.f32.mrb[0].mxu0
        %v1348 = vadd.f32 %v1220, %v1347
        %v1349 = vpop.f32.mrb[0].mxu0
        %1350 = vdwg.mxu0
        %v1351 = vmax.f32 %v1313, 0.0
        %v1352 = vmax.f32 %v1318, 0.0
        %v1353 = vmax.f32 %v1323, 0.0
        %v1354 = vmax.f32 %v1328, 0.0
        %v1355 = vmax.f32 %v1333, 0.0
        %v1356 = vmax.f32 %v1338, 0.0
        %v1357 = vmax.f32 %v1343, 0.0
        %v1358 = vmax.f32 %v1348, 0.0
        %v1359 = vld [vmem:[%s13] sm:$0xff]
        %v1360 = vld [vmem:[%s13 + $0x8] sm:$0xff]
        %v1361 = vld [vmem:[%s13 + $0x10] sm:$0xff]
        %v1362 = vld [vmem:[%s13 + $0x18] sm:$0xff]
        %v1363 = vld [vmem:[%s14] sm:$0x1]
        %v1365 = vlaneseq
        %v1366 = vshrl.u32 %v1365, 7
        %v1367 = vsub.s32 0, %v1366
        %v1368 = vrot.slane %v1363, %v1367
        %vm1370 = vcmask 261120
        %v1372 = vsel %vm1370, %v1351, 0
        %v1375 = vsel %vm1370, %v1352, 0
        %v1378 = vsel %vm1370, %v1353, 0
        %v1381 = vsel %vm1370, %v1354, 0
        %v1384 = vsel %vm1370, %v1355, 0
        %v1387 = vsel %vm1370, %v1356, 0
        %v1390 = vsel %vm1370, %v1357, 0
        %v1393 = vsel %vm1370, %v1358, 0
        %1395 = vmatprep.subr.mxu0 0.0
        %1396 = vmatpush1.msra.mxu0 %v1359
        %1397 = vmatprep.subr.mxu0 0.0
        %1398 = vmatpush1.msra.mxu0 %v1360
        %1399 = vmatprep.subr.mxu0 0.0
        %1400 = vmatpush1.msra.mxu0 %v1361
        %1401 = vmatprep.subr.mxu0 0.0
        %1402 = vmatpush1.msra.mxu0 %v1362
        %1403 = vmatprep.subr.mxu0 0.0
        %1404 = vmatpush1.msra.mxu0 0.0
        %1405 = vmatprep.subr.mxu0 0.0
        %1406 = vmatpush1.msra.mxu0 0.0
        %1407 = vmatprep.subr.mxu0 0.0
        %1408 = vmatpush1.msra.mxu0 0.0
        %1409 = vmatprep.subr.mxu0 0.0
        %1410 = vmatpush1.msra.mxu0 0.0
        %1411 = vmatprep.subr.mxu0 0.0
        %1412 = vmatpush1.msra.mxu0 0.0
        %1413 = vmatprep.subr.mxu0 0.0
        %1414 = vmatpush1.msra.mxu0 0.0
        %1415 = vmatprep.subr.mxu0 0.0
        %1416 = vmatpush1.msra.mxu0 0.0
        %1417 = vmatprep.subr.mxu0 0.0
        %1418 = vmatpush1.msra.mxu0 0.0
        %1419 = vmatprep.subr.mxu0 0.0
        %1420 = vmatpush1.msra.mxu0 0.0
        %1421 = vmatprep.subr.mxu0 0.0
        %1422 = vmatpush1.msra.mxu0 0.0
        %1423 = vmatprep.subr.mxu0 0.0
        %1424 = vmatpush1.msra.mxu0 0.0
        %1425 = vmatprep.subr.mxu0 0.0
        %1426 = vmatpush1.msra.mxu0 0.0
        %1427 = vmatprep.subr.mxu0 0.0
        %1428 = vmatpush1.msra.mxu0 0.0
        %1429 = vmatprep.subr.mxu0 0.0
        %1430 = vmatpush1.msra.mxu0 0.0
        %1431 = vmatprep.subr.mxu0 0.0
        %1432 = vmatpush1.msra.mxu0 0.0
        %1433 = vmatprep.subr.mxu0 0.0
        %1434 = vmatpush1.msra.mxu0 0.0
        %1435 = vmatprep.subr.mxu0 0.0
        %1436 = vmatpush1.msra.mxu0 0.0
        %1437 = vmatprep.subr.mxu0 0.0
        %1438 = vmatpush1.msra.mxu0 0.0
        %1439 = vmatprep.subr.mxu0 0.0
        %1440 = vmatpush1.msra.mxu0 0.0
        %1441 = vmatprep.subr.mxu0 0.0
        %1442 = vmatpush1.msra.mxu0 0.0
        %1443 = vmatprep.subr.mxu0 0.0
        %1444 = vmatpush1.msra.mxu0 0.0
        %1445 = vmatprep.subr.mxu0 0.0
        %1446 = vmatpush1.msra.mxu0 0.0
        %1447 = vmatprep.subr.mxu0 0.0
        %1448 = vmatpush1.msra.mxu0 0.0
        %1449 = vmatprep.subr.mxu0 0.0
        %1450 = vmatpush1.msra.mxu0 0.0
        %1451 = vmatprep.subr.mxu0 0.0
        %1452 = vmatpush1.msra.mxu0 0.0
        %1453 = vmatprep.subr.mxu0 0.0
        %1454 = vmatpush1.msra.mxu0 0.0
        %1455 = vmatprep.subr.mxu0 0.0
        %1456 = vmatpush1.msra.mxu0 0.0
        %1457 = vmatprep.subr.mxu0 0.0
        %1458 = vmatpush1.msra.mxu0 0.0
        %1459 = vmatprep.mubr.f32.mxu0 0.0
        %1460 = vmatmul.mubr.f32.gmra.mrb[0].mxu0 %v1372
        %v1461 = vpop.f32.mrb[0].mxu0
        %v1462 = vadd.f32 %v1368, %v1461
        %v1463 = vpop.f32.mrb[0].mxu0
        %1464 = vmatprep.mubr.f32.mxu0 0.0
        %1465 = vmatmul.mubr.f32.gmra.mrb[0].mxu0 %v1375
        %v1466 = vpop.f32.mrb[0].mxu0
        %v1467 = vadd.f32 %v1368, %v1466
        %v1468 = vpop.f32.mrb[0].mxu0
        %1469 = vmatprep.mubr.f32.mxu0 0.0
        %1470 = vmatmul.mubr.f32.gmra.mrb[0].mxu0 %v1378
        %v1471 = vpop.f32.mrb[0].mxu0
        %v1472 = vadd.f32 %v1368, %v1471
        %v1473 = vpop.f32.mrb[0].mxu0
        %1474 = vmatprep.mubr.f32.mxu0 0.0
        %1475 = vmatmul.mubr.f32.gmra.mrb[0].mxu0 %v1381
        %v1476 = vpop.f32.mrb[0].mxu0
        %v1477 = vadd.f32 %v1368, %v1476
        %v1478 = vpop.f32.mrb[0].mxu0
        %1479 = vmatprep.mubr.f32.mxu0 0.0
        %1480 = vmatmul.mubr.f32.gmra.mrb[0].mxu0 %v1384
        %v1481 = vpop.f32.mrb[0].mxu0
        %v1482 = vadd.f32 %v1368, %v1481
        %v1483 = vpop.f32.mrb[0].mxu0
        %1484 = vmatprep.mubr.f32.mxu0 0.0
        %1485 = vmatmul.mubr.f32.gmra.mrb[0].mxu0 %v1387
        %v1486 = vpop.f32.mrb[0].mxu0
        %v1487 = vadd.f32 %v1368, %v1486
        %v1488 = vpop.f32.mrb[0].mxu0
        %1489 = vmatprep.mubr.f32.mxu0 0.0
        %1490 = vmatmul.mubr.f32.gmra.mrb[0].mxu0 %v1390
        %v1491 = vpop.f32.mrb[0].mxu0
        %v1492 = vadd.f32 %v1368, %v1491
        %v1493 = vpop.f32.mrb[0].mxu0
        %1494 = vmatprep.mubr.f32.mxu0 0.0
        %1495 = vmatmul.mubr.f32.gmra.mrb[0].mxu0 %v1393
        %v1496 = vpop.f32.mrb[0].mxu0
        %v1497 = vadd.f32 %v1368, %v1496
        %v1498 = vpop.f32.mrb[0].mxu0
        %1499 = vdwg.mxu0
        %v1500 = vmax.f32 %v1462, %v1482
        %v1501 = vmax.f32 %v1467, %v1487
        %v1502 = vmax.f32 %v1472, %v1492
        %v1503 = vmax.f32 %v1477, %v1497
        %v1504 = vmax.f32 %v1500, %v1501
        %v1505 = vmax.f32 %v1502, %v1503
        %v1506 = vmax.f32 %v1504, %v1505
        %v1507 = vrot.slane %v1506, 4
        %v1508 = vmax.f32 %v1506, %v1507
        %v1509 = vrot.slane %v1508, 2
        %v1510 = vmax.f32 %v1508, %v1509
        %v1511 = vrot.slane %v1510, 1
        %v1512 = vmax.f32 %v1510, %v1511
        %p1513 = scmp.eq.s32.totalorder %s27, 0
        // Predicated region
        $region81: #{tpu_custom_call.1} parent=79 // pred_check
          %p1514 = pneg %p1513
        $region82: #{tpu_custom_call.1} parent=79 // pred_check_branch
          %1516 = sbr.rel (%p1514) target = $region84
        $region83: #{tpu_custom_call.1} parent=79 // pred_region
          %1517 = vst [vmem:[#allocation2] sm:$0x1] %v1512
        $region84: #{tpu_custom_call.1} parent=79 // pred_fallthru
          _
        %p1518 = scmp.ne.s32.totalorder %s27, 0
        // Predicated region
        $region85: #{tpu_custom_call.1} parent=79 // pred_check
          %p1519 = pneg %p1518
        $region86: #{tpu_custom_call.1} parent=79 // pred_check_branch
          %1521 = sbr.rel (%p1519) target = $region88
        $region87: #{tpu_custom_call.1} parent=79 // pred_region
          %v1522 = vld [vmem:[#allocation2] sm:$0x1]
          %v1523 = vmax.f32 %v1522, %v1512
          %1524 = vst [vmem:[#allocation2] sm:$0x1] %v1523
        $region88: #{tpu_custom_call.1} parent=79 // pred_fallthru
          _
        // Predicated region
        $region89: #{tpu_custom_call.1} parent=79 // pred_check
          %p1525 = pneg %p360
        $region90: #{tpu_custom_call.1} parent=79 // pred_check_branch
          %1527 = sbr.rel (%p1525) target = $region92
        $region91: #{tpu_custom_call.1} parent=79 // pred_region
          %s1529 = ssub.s32 16, 16
          %1530 = vsyncadd [#allocation3], %s1529
          %s1532 = sshll.u32 [#allocation2], 4
          %s1533 = int_to_ptr.vmem [resolvable:$true] %s1532
          %1535 = dma.vmem_to_hbm [thread:$0]  %s1533, 16, %s15, [#allocation3]
        $region92: #{tpu_custom_call.1} parent=79 // pred_fallthru
          _
        // Predicated region
        $region93: #{tpu_custom_call.1} parent=79 // pred_check
          %p1536 = pneg %p360
        $region94: #{tpu_custom_call.1} parent=79 // pred_check_branch
          %1538 = sbr.rel (%p1536) target = $region96
        $region95: #{tpu_custom_call.1} parent=79 // pred_region
          %1539 = dma.done [#allocation3], 16
        $region96: #{tpu_custom_call.1} parent=79 // pred_fallthru
          _
      $region80: #{tpu_custom_call.1} parent=5 // pred_fallthru
        _
      %p1540 = scmp.le.s32.totalorder 2, %s22
      // Predicated region
      $region97: #{tpu_custom_call.1} parent=5 // pred_check
        %p1541 = pneg %p1540
      $region98: #{tpu_custom_call.1} parent=5 // pred_check_branch
        %1543 = sbr.rel (%p1541) target = $region100
      $region99: #{tpu_custom_call.1} parent=5 // pred_region
        %s1544 = ssub.s32 %s22, 2
      $region100: #{tpu_custom_call.1} parent=5 // pred_fallthru
        _
    $region6: #{tpu_custom_call.1} parent=1 // loop_footer
      %s26 = sadd.s32 1, %s22
    $region7: #{tpu_custom_call.1} parent=1 // loop_footer_branch
      %21 = sbr.rel target = $region3
    $region8: #{tpu_custom_call.1} parent=1 // loop_exit
      _
    %1545 = vsyncpa [#allocation3], 1
    %s1546 = scalar_lea.sflag [#allocation3], 1
    %1547 = vsyncpa %s1546, 1

</llo_original>
